<compile_context>
chip_gen: v5e
topology: v5e:2x2
jax: 0.10.0
libtpu: 0.0.40
codegen_flags: <defaults>
</compile_context>

<pallas_src>
import jax
import jax.numpy as jnp
from jax.experimental import pallas as pl
from jax.experimental.pallas import tpu as pltpu

LANE = 128     # vreg lane width
SUBLANE = 8    # f32 sublane count


def _round_up(n, m):
    return ((n + m - 1) // m) * m


def _mlp_kernel(x_ref,
                w1_ref, b1_ref,
                w2_ref, b2_ref,
                w3_ref, b3_ref,
                w4_ref, b4_ref,
                o_ref):
    """Fused 4-layer MLP for one batch tile.  bf16 MXU operands, f32 accumulate."""
    h = x_ref[...]                                   # (tile, in_pad) bf16

    # layer 1: Linear + sigmoid
    h = jnp.dot(h, w1_ref[...], preferred_element_type=jnp.float32) + b1_ref[...]
    h = jax.nn.sigmoid(h)

    # layer 2: Linear + sigmoid
    h = jnp.dot(h.astype(jnp.bfloat16), w2_ref[...],
                preferred_element_type=jnp.float32) + b2_ref[...]
    h = jax.nn.sigmoid(h)

    # layer 3: Linear + sigmoid
    h = jnp.dot(h.astype(jnp.bfloat16), w3_ref[...],
                preferred_element_type=jnp.float32) + b3_ref[...]
    h = jax.nn.sigmoid(h)

    # layer 4: Linear (no activation, matches forward())
    out = jnp.dot(h.astype(jnp.bfloat16), w4_ref[...],
                  preferred_element_type=jnp.float32) + b4_ref[...]
    o_ref[...] = out.astype(o_ref.dtype)


def _pad_params(params):
    """Zero-pad every weight to (128k_in, 128k_out) bf16 and bias to (1, 128k_out) f32."""
    padded = {}
    for idx in range(1, 5):
        w = params[f"w{idx}"]                        # (din, dout) f32
        b = params[f"b{idx}"]                        # (dout,)     f32
        din, dout = w.shape
        din_p, dout_p = _round_up(din, LANE), _round_up(dout, LANE)
        wp = jnp.zeros((din_p, dout_p), jnp.bfloat16)
        wp = wp.at[:din, :dout].set(w.astype(jnp.bfloat16))
        bp = jnp.zeros((1, dout_p), jnp.float32)
        bp = bp.at[0, :dout].set(b)
        padded[f"w{idx}"] = wp
        padded[f"b{idx}"] = bp
    return padded


def discriminator_forward(x, params, *, batch_tile=256):
    """x: (B, input_size) float32.  params: w1..w4 (in,out) f32, b1..b4 (out,) f32."""
    B, in_size = x.shape
    out_size = params["w4"].shape[1]

    pp = _pad_params(params)
    in_pad = pp["w1"].shape[0]
    out_pad = pp["w4"].shape[1]

    # Fixed batch tile (multiple of 8 sublanes); pad batch so the grid divides evenly.
    batch_tile = _round_up(min(batch_tile, _round_up(B, SUBLANE)), SUBLANE)
    B_pad = _round_up(B, batch_tile)
    grid = B_pad // batch_tile

    # Lane-pad x and cast to bf16 (halves activation HBM traffic; first matmul is bf16).
    x_p = jnp.zeros((B_pad, in_pad), jnp.bfloat16)
    x_p = x_p.at[:B, :in_size].set(x.astype(jnp.bfloat16))

    # Weights/biases: whole-array resident in VMEM, no block pipelining (no
    # double-buffering of block-invariant operands).
    resident = pl.BlockSpec(memory_space=pltpu.MemorySpace.VMEM)

    in_specs = [
        pl.BlockSpec((batch_tile, in_pad), lambda i: (i, 0)),
        resident, resident,   # w1, b1
        resident, resident,   # w2, b2
        resident, resident,   # w3, b3
        resident, resident,   # w4, b4
    ]
    out_spec = pl.BlockSpec((batch_tile, out_pad), lambda i: (i, 0))

    out_padded = pl.pallas_call(
        _mlp_kernel,
        out_shape=jax.ShapeDtypeStruct((B_pad, out_pad), jnp.float32),
        grid_spec=pltpu.PrefetchScalarGridSpec(
            num_scalar_prefetch=0,
            grid=(grid,),
            in_specs=in_specs,
            out_specs=out_spec,
        ),
        compiler_params=pltpu.CompilerParams(
            dimension_semantics=("parallel",),          # megacore shard over batch tiles
            vmem_limit_bytes=32 * 1024 * 1024,          # explicit budget (fits v5e/v6e/v7x)
        ),
    )(x_p,
      pp["w1"], pp["b1"],
      pp["w2"], pp["b2"],
      pp["w3"], pp["b3"],
      pp["w4"], pp["b4"])

    # Strip batch + lane padding.
    return out_padded[:B, :out_size]


def init_params(key, input_size, h1, h2, h3, output_size):
    """nn.Linear-style init U(-1/sqrt(fan_in), 1/sqrt(fan_in)).
    Weights stored as (in_features, out_features); biases as (out_features,)."""
    dims = [(input_size, h1), (h1, h2), (h2, h3), (h3, output_size)]
    params = {}
    for idx, (din, dout) in enumerate(dims, start=1):
        key, kw, kb = jax.random.split(key, 3)
        bound = 1.0 / jnp.sqrt(jnp.float32(din))
        params[f"w{idx}"] = jax.random.uniform(
            kw, (din, dout), jnp.float32, minval=-bound, maxval=bound)
        params[f"b{idx}"] = jax.random.uniform(
            kb, (dout,), jnp.float32, minval=-bound, maxval=bound)
    return params


def reference_forward(x, params):
    """Pure-JAX reference with the same bf16-operand / f32-accumulate math."""
    def dense(h, w, b):
        return jnp.dot(h.astype(jnp.bfloat16), w.astype(jnp.bfloat16),
                       preferred_element_type=jnp.float32) + b
    h = jax.nn.sigmoid(dense(x, params["w1"], params["b1"]))
    h = jax.nn.sigmoid(dense(h, params["w2"], params["b2"]))
    h = jax.nn.sigmoid(dense(h, params["w3"], params["b3"]))
    return dense(h, params["w4"], params["b4"])


if __name__ == "__main__":
    # Shapes consistent with the module's forward (tiny features, moderate batch
    # so the grid has 2 pipelined / megacore-shardable steps).
    batch, input_size, h1, h2, h3, output_size = 512, 16, 32, 32, 32, 8

    key = jax.random.PRNGKey(0)
    key, kx = jax.random.split(key)
    x = jax.random.normal(kx, (batch, input_size), jnp.float32)
    params = init_params(key, input_size, h1, h2, h3, output_size)

    out = discriminator_forward(x, params, batch_tile=256)
    out = jax.block_until_ready(out)

    ref = reference_forward(x, params)
    assert out.shape == (batch, output_size)
    max_err = float(jnp.max(jnp.abs(out - ref)))
    assert jnp.allclose(out, ref, atol=2e-2, rtol=2e-2), f"mismatch vs reference: {max_err}"

    print("KERNEL_OK")
</pallas_src>

<mosaic_0001>
module attributes {stable_mosaic.version = 11 : i64} {
  func.func @_mlp_kernel(%arg0: i32, %arg1: memref<256x128xbf16, #tpu.memory_space<vmem>>, %arg2: memref<128x128xbf16, #tpu.memory_space<vmem>>, %arg3: memref<1x128xf32, #tpu.memory_space<vmem>>, %arg4: memref<128x128xbf16, #tpu.memory_space<vmem>>, %arg5: memref<1x128xf32, #tpu.memory_space<vmem>>, %arg6: memref<128x128xbf16, #tpu.memory_space<vmem>>, %arg7: memref<1x128xf32, #tpu.memory_space<vmem>>, %arg8: memref<128x128xbf16, #tpu.memory_space<vmem>>, %arg9: memref<1x128xf32, #tpu.memory_space<vmem>>, %arg10: memref<256x128xf32, #tpu.memory_space<vmem>>) attributes {dimension_semantics = [#tpu.dimension_semantics<parallel>], iteration_bounds = array<i64: 2>, scalar_prefetch = 0 : i64, scratch_operands = 0 : i64, tpu.core_type = #tpu.core_type<tc>, window_params = [{transform_indices = @transform_0, window_bounds = array<i64: 256, 128>}, {pipeline_mode = #tpu.pipeline_mode<synchronous>, transform_indices = @transform_1, window_bounds = array<i64: 128, 128>}, {pipeline_mode = #tpu.pipeline_mode<synchronous>, transform_indices = @transform_2, window_bounds = array<i64: 1, 128>}, {pipeline_mode = #tpu.pipeline_mode<synchronous>, transform_indices = @transform_3, window_bounds = array<i64: 128, 128>}, {pipeline_mode = #tpu.pipeline_mode<synchronous>, transform_indices = @transform_4, window_bounds = array<i64: 1, 128>}, {pipeline_mode = #tpu.pipeline_mode<synchronous>, transform_indices = @transform_5, window_bounds = array<i64: 128, 128>}, {pipeline_mode = #tpu.pipeline_mode<synchronous>, transform_indices = @transform_6, window_bounds = array<i64: 1, 128>}, {pipeline_mode = #tpu.pipeline_mode<synchronous>, transform_indices = @transform_7, window_bounds = array<i64: 128, 128>}, {pipeline_mode = #tpu.pipeline_mode<synchronous>, transform_indices = @transform_8, window_bounds = array<i64: 1, 128>}, {transform_indices = @transform_9, window_bounds = array<i64: 256, 128>}]} {
    %c0 = arith.constant 0 : index
    %c0_0 = arith.constant 0 : index
    %0 = vector.load %arg1[%c0, %c0_0] : memref<256x128xbf16, #tpu.memory_space<vmem>>, vector<256x128xbf16>
    %c0_1 = arith.constant 0 : index
    %c0_2 = arith.constant 0 : index
    %1 = vector.load %arg2[%c0_1, %c0_2] : memref<128x128xbf16, #tpu.memory_space<vmem>>, vector<128x128xbf16>
    %cst = arith.constant dense<0.000000e+00> : vector<256x128xf32>
    %2 = tpu.matmul %0, %1, %cst {dimension_numbers = #tpu.dot_dimension_numbers<[1], [0], [0], [1], [0, 0, 1, 1], [], []>} : vector<256x128xbf16>, vector<128x128xbf16>, vector<256x128xf32> -> vector<256x128xf32>
    %c0_3 = arith.constant 0 : index
    %c0_4 = arith.constant 0 : index
    %3 = vector.load %arg3[%c0_3, %c0_4] : memref<1x128xf32, #tpu.memory_space<vmem>>, vector<1x128xf32>
    %4 = vector.broadcast %3 : vector<1x128xf32> to vector<256x128xf32>
    %5 = arith.addf %2, %4 : vector<256x128xf32>
    %6 = arith.negf %5 : vector<256x128xf32>
    %7 = math.exp %6 : vector<256x128xf32>
    %cst_5 = arith.constant 1.000000e+00 : f32
    %8 = vector.broadcast %cst_5 : f32 to vector<256x128xf32>
    %9 = arith.addf %8, %7 : vector<256x128xf32>
    %10 = arith.divf %8, %9 : vector<256x128xf32>
    %11 = arith.truncf %10 : vector<256x128xf32> to vector<256x128xbf16>
    %c0_6 = arith.constant 0 : index
    %c0_7 = arith.constant 0 : index
    %12 = vector.load %arg4[%c0_6, %c0_7] : memref<128x128xbf16, #tpu.memory_space<vmem>>, vector<128x128xbf16>
    %cst_8 = arith.constant dense<0.000000e+00> : vector<256x128xf32>
    %13 = tpu.matmul %11, %12, %cst_8 {dimension_numbers = #tpu.dot_dimension_numbers<[1], [0], [0], [1], [0, 0, 1, 1], [], []>} : vector<256x128xbf16>, vector<128x128xbf16>, vector<256x128xf32> -> vector<256x128xf32>
    %c0_9 = arith.constant 0 : index
    %c0_10 = arith.constant 0 : index
    %14 = vector.load %arg5[%c0_9, %c0_10] : memref<1x128xf32, #tpu.memory_space<vmem>>, vector<1x128xf32>
    %15 = vector.broadcast %14 : vector<1x128xf32> to vector<256x128xf32>
    %16 = arith.addf %13, %15 : vector<256x128xf32>
    %17 = arith.negf %16 : vector<256x128xf32>
    %18 = math.exp %17 : vector<256x128xf32>
    %cst_11 = arith.constant 1.000000e+00 : f32
    %19 = vector.broadcast %cst_11 : f32 to vector<256x128xf32>
    %20 = arith.addf %19, %18 : vector<256x128xf32>
    %21 = arith.divf %19, %20 : vector<256x128xf32>
    %22 = arith.truncf %21 : vector<256x128xf32> to vector<256x128xbf16>
    %c0_12 = arith.constant 0 : index
    %c0_13 = arith.constant 0 : index
    %23 = vector.load %arg6[%c0_12, %c0_13] : memref<128x128xbf16, #tpu.memory_space<vmem>>, vector<128x128xbf16>
    %cst_14 = arith.constant dense<0.000000e+00> : vector<256x128xf32>
    %24 = tpu.matmul %22, %23, %cst_14 {dimension_numbers = #tpu.dot_dimension_numbers<[1], [0], [0], [1], [0, 0, 1, 1], [], []>} : vector<256x128xbf16>, vector<128x128xbf16>, vector<256x128xf32> -> vector<256x128xf32>
    %c0_15 = arith.constant 0 : index
    %c0_16 = arith.constant 0 : index
    %25 = vector.load %arg7[%c0_15, %c0_16] : memref<1x128xf32, #tpu.memory_space<vmem>>, vector<1x128xf32>
    %26 = vector.broadcast %25 : vector<1x128xf32> to vector<256x128xf32>
    %27 = arith.addf %24, %26 : vector<256x128xf32>
    %28 = arith.negf %27 : vector<256x128xf32>
    %29 = math.exp %28 : vector<256x128xf32>
    %cst_17 = arith.constant 1.000000e+00 : f32
    %30 = vector.broadcast %cst_17 : f32 to vector<256x128xf32>
    %31 = arith.addf %30, %29 : vector<256x128xf32>
    %32 = arith.divf %30, %31 : vector<256x128xf32>
    %33 = arith.truncf %32 : vector<256x128xf32> to vector<256x128xbf16>
    %c0_18 = arith.constant 0 : index
    %c0_19 = arith.constant 0 : index
    %34 = vector.load %arg8[%c0_18, %c0_19] : memref<128x128xbf16, #tpu.memory_space<vmem>>, vector<128x128xbf16>
    %cst_20 = arith.constant dense<0.000000e+00> : vector<256x128xf32>
    %35 = tpu.matmul %33, %34, %cst_20 {dimension_numbers = #tpu.dot_dimension_numbers<[1], [0], [0], [1], [0, 0, 1, 1], [], []>} : vector<256x128xbf16>, vector<128x128xbf16>, vector<256x128xf32> -> vector<256x128xf32>
    %c0_21 = arith.constant 0 : index
    %c0_22 = arith.constant 0 : index
    %36 = vector.load %arg9[%c0_21, %c0_22] : memref<1x128xf32, #tpu.memory_space<vmem>>, vector<1x128xf32>
    %37 = vector.broadcast %36 : vector<1x128xf32> to vector<256x128xf32>
    %38 = arith.addf %35, %37 : vector<256x128xf32>
    %c0_23 = arith.constant 0 : index
    %c0_24 = arith.constant 0 : index
    %39 = vector.load %arg10[%c0_23, %c0_24] : memref<256x128xf32, #tpu.memory_space<vmem>>, vector<256x128xf32>
    tpu.vector_store %arg10[%c0_23, %c0_24], %38 {strides = array<i32>} : memref<256x128xf32, #tpu.memory_space<vmem>>, vector<256x128xf32>,
    return
  }
  func.func @transform_0(%arg0: i32) -> (i32, i32) {
    %c0_i32 = arith.constant 0 : i32
    %c0_i32_0 = arith.constant 0 : i32
    return %arg0, %c0_i32 : i32, i32
  }
  func.func @transform_1(%arg0: i32) -> (i32, i32) {
    %c0_i32 = arith.constant 0 : i32
    %c0_i32_0 = arith.constant 0 : i32
    %c0_i32_1 = arith.constant 0 : i32
    return %c0_i32, %c0_i32_0 : i32, i32
  }
  func.func @transform_2(%arg0: i32) -> (i32, i32) {
    %c0_i32 = arith.constant 0 : i32
    %c0_i32_0 = arith.constant 0 : i32
    %c0_i32_1 = arith.constant 0 : i32
    return %c0_i32, %c0_i32_0 : i32, i32
  }
  func.func @transform_3(%arg0: i32) -> (i32, i32) {
    %c0_i32 = arith.constant 0 : i32
    %c0_i32_0 = arith.constant 0 : i32
    %c0_i32_1 = arith.constant 0 : i32
    return %c0_i32, %c0_i32_0 : i32, i32
  }
  func.func @transform_4(%arg0: i32) -> (i32, i32) {
    %c0_i32 = arith.constant 0 : i32
    %c0_i32_0 = arith.constant 0 : i32
    %c0_i32_1 = arith.constant 0 : i32
    return %c0_i32, %c0_i32_0 : i32, i32
  }
  func.func @transform_5(%arg0: i32) -> (i32, i32) {
    %c0_i32 = arith.constant 0 : i32
    %c0_i32_0 = arith.constant 0 : i32
    %c0_i32_1 = arith.constant 0 : i32
    return %c0_i32, %c0_i32_0 : i32, i32
  }
  func.func @transform_6(%arg0: i32) -> (i32, i32) {
    %c0_i32 = arith.constant 0 : i32
    %c0_i32_0 = arith.constant 0 : i32
    %c0_i32_1 = arith.constant 0 : i32
    return %c0_i32, %c0_i32_0 : i32, i32
  }
  func.func @transform_7(%arg0: i32) -> (i32, i32) {
    %c0_i32 = arith.constant 0 : i32
    %c0_i32_0 = arith.constant 0 : i32
    %c0_i32_1 = arith.constant 0 : i32
    return %c0_i32, %c0_i32_0 : i32, i32
  }
  func.func @transform_8(%arg0: i32) -> (i32, i32) {
    %c0_i32 = arith.constant 0 : i32
    %c0_i32_0 = arith.constant 0 : i32
    %c0_i32_1 = arith.constant 0 : i32
    return %c0_i32, %c0_i32_0 : i32, i32
  }
  func.func @transform_9(%arg0: i32) -> (i32, i32) {
    %c0_i32 = arith.constant 0 : i32
    %c0_i32_0 = arith.constant 0 : i32
    return %arg0, %c0_i32 : i32, i32
  }
}

</mosaic_0001>

<llo_original>
// kernel: tpu_custom_call.1
$region0: #{tpu_custom_call.1}
  #allocation0 [shape = 'u32[]', space=smem, size = 0x4, offset = 0x4, fixed_abs, tag = 'smem constant byte address 0x4 - core index']
  #allocation1 [shape = 'u32[72,128]{1,0:T(1,128)}', space=vmem, size = 0x9000, scoped, tag = 'internal scratch']
  %s0 = inlined_call_operand.hbm [shape: bf16[512,128], index: 0, kind: input, shape index: {}]
  %s1 = inlined_call_operand.hbm [shape: bf16[128,128], index: 1, kind: input, shape index: {}]
  %s2 = inlined_call_operand.vmem [shape: f32[1,128], index: 2, kind: input, shape index: {}]
  %s3 = inlined_call_operand.hbm [shape: bf16[128,128], index: 3, kind: input, shape index: {}]
  %s4 = inlined_call_operand.vmem [shape: f32[1,128], index: 4, kind: input, shape index: {}]
  %s5 = inlined_call_operand.hbm [shape: bf16[128,128], index: 5, kind: input, shape index: {}]
  %s6 = inlined_call_operand.vmem [shape: f32[1,128], index: 6, kind: input, shape index: {}]
  %s7 = inlined_call_operand.hbm [shape: bf16[128,128], index: 7, kind: input, shape index: {}]
  %s8 = inlined_call_operand.vmem [shape: f32[1,128], index: 8, kind: input, shape index: {}]
  %s9 = inlined_call_operand.hbm [shape: f32[512,128], index: 9, kind: output, shape index: {}]
  %s10 = sld [smem:[#allocation0]]
  $region89: #{tpu_custom_call.1} parent=0
    _
  %s12 = ssub.s32 1, %s10
  %s13 = scalar_select 0, %s12, %s10
  $region1: #{tpu_custom_call.1} parent=0
    #allocation2 [shape = 'u8[131072]{0}', space=vmem, size = 0x20000, scoped, tag = 'input window, operand 0']
    #allocation3 [shape = 's32[2]{0}', space=sflag, size = 0x8, scoped, tag = 'scoped memory for tpu_custom_call.1']
    #allocation4 [shape = 's32[2]{0}', space=sflag, size = 0x8, scoped, tag = 'scoped memory for tpu_custom_call.1']
    #allocation5 [shape = 'u8[32768]{0}', space=vmem, size = 0x8000, scoped, tag = 'input window, operand 1, single buffered']
    #allocation6 [shape = 's32[1]{0}', space=sflag, size = 0x4, scoped, tag = 'scoped memory for tpu_custom_call.1']
    #allocation7 [shape = 'u8[32768]{0}', space=vmem, size = 0x8000, scoped, tag = 'input window, operand 3, single buffered']
    #allocation8 [shape = 'u8[32768]{0}', space=vmem, size = 0x8000, scoped, tag = 'input window, operand 5, single buffered']
    #allocation9 [shape = 's32[1]{0}', space=sflag, size = 0x4, scoped, tag = 'scoped memory for tpu_custom_call.1']
    #allocation10 [shape = 'u8[32768]{0}', space=vmem, size = 0x8000, scoped, tag = 'input window, operand 7, single buffered']
    #allocation11 [shape = 'u8[262144]{0}', space=vmem, size = 0x40000, scoped, tag = 'output window, operand 0']
    %14 = vsyncpa [#allocation3], 0
    %s15 = scalar_lea.sflag [#allocation3], 1
    %16 = vsyncpa %s15, 0
    %17 = vsyncpa [#allocation6], 0
    %18 = vsyncpa [#allocation9], 0
    %19 = vsyncpa [#allocation4], 0
    %s20 = scalar_lea.sflag [#allocation4], 1
    %21 = vsyncpa %s20, 0
    loop: start=0, step=1, limit=4
    $region2: #{tpu_custom_call.1} parent=1 // loop_pre_header
      _
    $region3: #{tpu_custom_call.1} parent=1 // loop_header
      %s23 = sphi 0, %s27
      %p24 = scmp.ge.s32.totalorder %s23, 4
      %s33 = sphi 0, %s35
      %s36 = sphi 0, %s33
      %s37 = sphi 0, %s36
      %s53 = sphi 0, %s37
      %s57 = sphi 0, %s57
      %s59 = sphi 0, %s57
      %s60 = sphi 0, %s59
      %s74 = sphi 0, %s60
      %s78 = sphi 0, %s78
      %s80 = sphi 0, %s78
      %s81 = sphi 0, %s80
      %s95 = sphi 0, %s81
      %s99 = sphi 0, %s99
      %s101 = sphi 0, %s99
      %s102 = sphi 0, %s101
      %s116 = sphi 0, %s102
      %s120 = sphi 0, %s120
      %s122 = sphi 0, %s120
      %s123 = sphi 0, %s122
      %s137 = sphi 0, %s123
      %s141 = sphi 0, %s141
      %s143 = sphi 0, %s141
      %s144 = sphi 0, %s143
      %s158 = sphi 0, %s144
      %s162 = sphi 0, %s162
      %s164 = sphi 0, %s162
      %s165 = sphi 0, %s164
      %s179 = sphi 0, %s165
      %s183 = sphi 0, %s183
      %s185 = sphi 0, %s183
      %s186 = sphi 0, %s185
      %s200 = sphi 0, %s186
      %s204 = sphi 0, %s204
      %s206 = sphi 0, %s204
      %s207 = sphi 0, %s206
      %s221 = sphi 0, %s207
      %s227 = sphi 0, %s229
      %s230 = sphi 0, %s227
      %s231 = sphi 0, %s230
      %s247 = sphi 0, %s231
    $region4: #{tpu_custom_call.1} parent=1 // loop_header_branch
      %26 = sbr.rel (%p24) target = $region8
    $region5: #{tpu_custom_call.1} parent=1 // loop_body
      %s28 = ssub.s32 %s23, 1
      %s29 = ssub.s32 %s23, 2
      %s30 = sadd.s32 %s23, 1
      %s31 = ssub.s32 %s23, %s30
      %p32 = scmp.eq.s32.totalorder %s31, 0
      %s34 = sadd.s32 %s33, 1
      %s35 = scalar_select %p32, %s33, %s34
      %p38 = pneg %p32
      %p39 = scmp.eq.s32.totalorder %s23, 1
      %p40 = por %p38, %p39
      %p41 = scmp.ne.s32.totalorder %s33, %s36
      %p42 = scmp.eq.s32.totalorder %s23, 0
      %p43 = por %p41, %p42
      %p44 = scmp.ne.s32.totalorder %s33, %s36
      %p45 = scmp.eq.s32.totalorder %s28, 1
      %p46 = por %p44, %p45
      %p47 = scmp.ne.s32.totalorder %s36, %s37
      %p48 = scmp.eq.s32.totalorder %s28, 0
      %p49 = por %p47, %p48
      %p50 = scmp.ne.s32.totalorder %s36, %s37
      %p51 = scmp.eq.s32.totalorder %s29, 1
      %p52 = por %p50, %p51
      %p54 = scmp.ne.s32.totalorder %s37, %s53
      %p55 = scmp.eq.s32.totalorder %s29, 0
      %p56 = por %p54, %p55
      %s58 = sadd.s32 %s57, 1
      %p61 = scmp.eq.s32.totalorder %s23, 1
      %p62 = scmp.ne.s32.totalorder %s57, %s59
      %p63 = scmp.eq.s32.totalorder %s23, 0
      %p64 = por %p62, %p63
      %p65 = scmp.ne.s32.totalorder %s57, %s59
      %p66 = scmp.eq.s32.totalorder %s28, 1
      %p67 = por %p65, %p66
      %p68 = scmp.ne.s32.totalorder %s59, %s60
      %p69 = scmp.eq.s32.totalorder %s28, 0
      %p70 = por %p68, %p69
      %p71 = scmp.ne.s32.totalorder %s59, %s60
      %p72 = scmp.eq.s32.totalorder %s29, 1
      %p73 = por %p71, %p72
      %p75 = scmp.ne.s32.totalorder %s60, %s74
      %p76 = scmp.eq.s32.totalorder %s29, 0
      %p77 = por %p75, %p76
      %s79 = sadd.s32 %s78, 1
      %p82 = scmp.eq.s32.totalorder %s23, 1
      %p83 = scmp.ne.s32.totalorder %s78, %s80
      %p84 = scmp.eq.s32.totalorder %s23, 0
      %p85 = por %p83, %p84
      %p86 = scmp.ne.s32.totalorder %s78, %s80
      %p87 = scmp.eq.s32.totalorder %s28, 1
      %p88 = por %p86, %p87
      %p89 = scmp.ne.s32.totalorder %s80, %s81
      %p90 = scmp.eq.s32.totalorder %s28, 0
      %p91 = por %p89, %p90
      %p92 = scmp.ne.s32.totalorder %s80, %s81
      %p93 = scmp.eq.s32.totalorder %s29, 1
      %p94 = por %p92, %p93
      %p96 = scmp.ne.s32.totalorder %s81, %s95
      %p97 = scmp.eq.s32.totalorder %s29, 0
      %p98 = por %p96, %p97
      %s100 = sadd.s32 %s99, 1
      %p103 = scmp.eq.s32.totalorder %s23, 1
      %p104 = scmp.ne.s32.totalorder %s99, %s101
      %p105 = scmp.eq.s32.totalorder %s23, 0
      %p106 = por %p104, %p105
      %p107 = scmp.ne.s32.totalorder %s99, %s101
      %p108 = scmp.eq.s32.totalorder %s28, 1
      %p109 = por %p107, %p108
      %p110 = scmp.ne.s32.totalorder %s101, %s102
      %p111 = scmp.eq.s32.totalorder %s28, 0
      %p112 = por %p110, %p111
      %p113 = scmp.ne.s32.totalorder %s101, %s102
      %p114 = scmp.eq.s32.totalorder %s29, 1
      %p115 = por %p113, %p114
      %p117 = scmp.ne.s32.totalorder %s102, %s116
      %p118 = scmp.eq.s32.totalorder %s29, 0
      %p119 = por %p117, %p118
      %s121 = sadd.s32 %s120, 1
      %p124 = scmp.eq.s32.totalorder %s23, 1
      %p125 = scmp.ne.s32.totalorder %s120, %s122
      %p126 = scmp.eq.s32.totalorder %s23, 0
      %p127 = por %p125, %p126
      %p128 = scmp.ne.s32.totalorder %s120, %s122
      %p129 = scmp.eq.s32.totalorder %s28, 1
      %p130 = por %p128, %p129
      %p131 = scmp.ne.s32.totalorder %s122, %s123
      %p132 = scmp.eq.s32.totalorder %s28, 0
      %p133 = por %p131, %p132
      %p134 = scmp.ne.s32.totalorder %s122, %s123
      %p135 = scmp.eq.s32.totalorder %s29, 1
      %p136 = por %p134, %p135
      %p138 = scmp.ne.s32.totalorder %s123, %s137
      %p139 = scmp.eq.s32.totalorder %s29, 0
      %p140 = por %p138, %p139
      %s142 = sadd.s32 %s141, 1
      %p145 = scmp.eq.s32.totalorder %s23, 1
      %p146 = scmp.ne.s32.totalorder %s141, %s143
      %p147 = scmp.eq.s32.totalorder %s23, 0
      %p148 = por %p146, %p147
      %p149 = scmp.ne.s32.totalorder %s141, %s143
      %p150 = scmp.eq.s32.totalorder %s28, 1
      %p151 = por %p149, %p150
      %p152 = scmp.ne.s32.totalorder %s143, %s144
      %p153 = scmp.eq.s32.totalorder %s28, 0
      %p154 = por %p152, %p153
      %p155 = scmp.ne.s32.totalorder %s143, %s144
      %p156 = scmp.eq.s32.totalorder %s29, 1
      %p157 = por %p155, %p156
      %p159 = scmp.ne.s32.totalorder %s144, %s158
      %p160 = scmp.eq.s32.totalorder %s29, 0
      %p161 = por %p159, %p160
      %s163 = sadd.s32 %s162, 1
      %p166 = scmp.eq.s32.totalorder %s23, 1
      %p167 = scmp.ne.s32.totalorder %s162, %s164
      %p168 = scmp.eq.s32.totalorder %s23, 0
      %p169 = por %p167, %p168
      %p170 = scmp.ne.s32.totalorder %s162, %s164
      %p171 = scmp.eq.s32.totalorder %s28, 1
      %p172 = por %p170, %p171
      %p173 = scmp.ne.s32.totalorder %s164, %s165
      %p174 = scmp.eq.s32.totalorder %s28, 0
      %p175 = por %p173, %p174
      %p176 = scmp.ne.s32.totalorder %s164, %s165
      %p177 = scmp.eq.s32.totalorder %s29, 1
      %p178 = por %p176, %p177
      %p180 = scmp.ne.s32.totalorder %s165, %s179
      %p181 = scmp.eq.s32.totalorder %s29, 0
      %p182 = por %p180, %p181
      %s184 = sadd.s32 %s183, 1
      %p187 = scmp.eq.s32.totalorder %s23, 1
      %p188 = scmp.ne.s32.totalorder %s183, %s185
      %p189 = scmp.eq.s32.totalorder %s23, 0
      %p190 = por %p188, %p189
      %p191 = scmp.ne.s32.totalorder %s183, %s185
      %p192 = scmp.eq.s32.totalorder %s28, 1
      %p193 = por %p191, %p192
      %p194 = scmp.ne.s32.totalorder %s185, %s186
      %p195 = scmp.eq.s32.totalorder %s28, 0
      %p196 = por %p194, %p195
      %p197 = scmp.ne.s32.totalorder %s185, %s186
      %p198 = scmp.eq.s32.totalorder %s29, 1
      %p199 = por %p197, %p198
      %p201 = scmp.ne.s32.totalorder %s186, %s200
      %p202 = scmp.eq.s32.totalorder %s29, 0
      %p203 = por %p201, %p202
      %s205 = sadd.s32 %s204, 1
      %p208 = scmp.eq.s32.totalorder %s23, 1
      %p209 = scmp.ne.s32.totalorder %s204, %s206
      %p210 = scmp.eq.s32.totalorder %s23, 0
      %p211 = por %p209, %p210
      %p212 = scmp.ne.s32.totalorder %s204, %s206
      %p213 = scmp.eq.s32.totalorder %s28, 1
      %p214 = por %p212, %p213
      %p215 = scmp.ne.s32.totalorder %s206, %s207
      %p216 = scmp.eq.s32.totalorder %s28, 0
      %p217 = por %p215, %p216
      %p218 = scmp.ne.s32.totalorder %s206, %s207
      %p219 = scmp.eq.s32.totalorder %s29, 1
      %p220 = por %p218, %p219
      %p222 = scmp.ne.s32.totalorder %s207, %s221
      %p223 = scmp.eq.s32.totalorder %s29, 0
      %p224 = por %p222, %p223
      %s225 = ssub.s32 %s23, %s30
      %p226 = scmp.eq.s32.totalorder %s225, 0
      %s228 = sadd.s32 %s227, 1
      %s229 = scalar_select %p226, %s227, %s228
      %p232 = pneg %p226
      %p233 = scmp.eq.s32.totalorder %s23, 1
      %p234 = por %p232, %p233
      %p235 = scmp.ne.s32.totalorder %s227, %s230
      %p236 = scmp.eq.s32.totalorder %s23, 0
      %p237 = por %p235, %p236
      %p238 = scmp.ne.s32.totalorder %s227, %s230
      %p239 = scmp.eq.s32.totalorder %s28, 1
      %p240 = por %p238, %p239
      %p241 = scmp.ne.s32.totalorder %s230, %s231
      %p242 = scmp.eq.s32.totalorder %s28, 0
      %p243 = por %p241, %p242
      %p244 = scmp.ne.s32.totalorder %s230, %s231
      %p245 = scmp.eq.s32.totalorder %s29, 1
      %p246 = por %p244, %p245
      %p248 = scmp.ne.s32.totalorder %s231, %s247
      %p249 = scmp.eq.s32.totalorder %s29, 0
      %p250 = por %p248, %p249
      %p251 = scmp.le.s32.totalorder 1, %s23
      %p252 = scmp.lt.s32.totalorder %s23, 3
      %p253 = pnand %p251, %p252
      %p254 = pneg %p253
      // Predicated region
      $region9: #{tpu_custom_call.1} parent=5 // pred_check
        _
      $region10: #{tpu_custom_call.1} parent=5 // pred_check_branch
        %256 = sbr.rel (%p253) target = $region12
      $region11: #{tpu_custom_call.1} parent=5 // pred_region
        %s257 = ssub.s32 %s23, 1
        // Predicated region
        $region13: #{tpu_custom_call.1} parent=11 // pred_check
          %p258 = pneg %p70
        $region14: #{tpu_custom_call.1} parent=11 // pred_check_branch
          %260 = sbr.rel (%p258) target = $region16
        $region15: #{tpu_custom_call.1} parent=11 // pred_region
          %262 = vsyncadd [#allocation6], 0
          %s263 = sshll.u32 %s1, 4
          %s264 = int_to_ptr.hbm [resolvable:$true] %s263
          %s265 = sshll.u32 [#allocation5], 4
          %s266 = int_to_ptr.vmem [resolvable:$true] %s265
          %271 = dma.hbm_to_vmem [thread:$0]  %s264, 1024, %s266, [#allocation6], 64, 64, 4
        $region16: #{tpu_custom_call.1} parent=11 // pred_fallthru
          _
        // Predicated region
        $region17: #{tpu_custom_call.1} parent=11 // pred_check
          %p272 = pneg %p91
        $region18: #{tpu_custom_call.1} parent=11 // pred_check_branch
          %274 = sbr.rel (%p272) target = $region20
        $region19: #{tpu_custom_call.1} parent=11 // pred_region
          _
        $region20: #{tpu_custom_call.1} parent=11 // pred_fallthru
          _
        // Predicated region
        $region21: #{tpu_custom_call.1} parent=11 // pred_check
          %p275 = pneg %p112
        $region22: #{tpu_custom_call.1} parent=11 // pred_check_branch
          %277 = sbr.rel (%p275) target = $region24
        $region23: #{tpu_custom_call.1} parent=11 // pred_region
          %279 = vsyncadd [#allocation6], 0
          %s280 = sshll.u32 %s3, 4
          %s281 = int_to_ptr.hbm [resolvable:$true] %s280
          %s282 = sshll.u32 [#allocation7], 4
          %s283 = int_to_ptr.vmem [resolvable:$true] %s282
          %288 = dma.hbm_to_vmem [thread:$0]  %s281, 1024, %s283, [#allocation6], 64, 64, 4
        $region24: #{tpu_custom_call.1} parent=11 // pred_fallthru
          _
        // Predicated region
        $region25: #{tpu_custom_call.1} parent=11 // pred_check
          %p289 = pneg %p133
        $region26: #{tpu_custom_call.1} parent=11 // pred_check_branch
          %291 = sbr.rel (%p289) target = $region28
        $region27: #{tpu_custom_call.1} parent=11 // pred_region
          _
        $region28: #{tpu_custom_call.1} parent=11 // pred_fallthru
          _
        // Predicated region
        $region29: #{tpu_custom_call.1} parent=11 // pred_check
          %p292 = pneg %p154
        $region30: #{tpu_custom_call.1} parent=11 // pred_check_branch
          %294 = sbr.rel (%p292) target = $region32
        $region31: #{tpu_custom_call.1} parent=11 // pred_region
          %296 = vsyncadd [#allocation9], 0
          %s297 = sshll.u32 %s5, 4
          %s298 = int_to_ptr.hbm [resolvable:$true] %s297
          %s299 = sshll.u32 [#allocation8], 4
          %s300 = int_to_ptr.vmem [resolvable:$true] %s299
          %305 = dma.hbm_to_vmem [thread:$0]  %s298, 1024, %s300, [#allocation9], 64, 64, 4
        $region32: #{tpu_custom_call.1} parent=11 // pred_fallthru
          _
        // Predicated region
        $region33: #{tpu_custom_call.1} parent=11 // pred_check
          %p306 = pneg %p175
        $region34: #{tpu_custom_call.1} parent=11 // pred_check_branch
          %308 = sbr.rel (%p306) target = $region36
        $region35: #{tpu_custom_call.1} parent=11 // pred_region
          _
        $region36: #{tpu_custom_call.1} parent=11 // pred_fallthru
          _
        // Predicated region
        $region37: #{tpu_custom_call.1} parent=11 // pred_check
          %p309 = pneg %p196
        $region38: #{tpu_custom_call.1} parent=11 // pred_check_branch
          %311 = sbr.rel (%p309) target = $region40
        $region39: #{tpu_custom_call.1} parent=11 // pred_region
          %313 = vsyncadd [#allocation9], 0
          %s314 = sshll.u32 %s7, 4
          %s315 = int_to_ptr.hbm [resolvable:$true] %s314
          %s316 = sshll.u32 [#allocation10], 4
          %s317 = int_to_ptr.vmem [resolvable:$true] %s316
          %322 = dma.hbm_to_vmem [thread:$0]  %s315, 1024, %s317, [#allocation9], 64, 64, 4
        $region40: #{tpu_custom_call.1} parent=11 // pred_fallthru
          _
        // Predicated region
        $region41: #{tpu_custom_call.1} parent=11 // pred_check
          %p323 = pneg %p217
        $region42: #{tpu_custom_call.1} parent=11 // pred_check_branch
          %325 = sbr.rel (%p323) target = $region44
        $region43: #{tpu_custom_call.1} parent=11 // pred_region
          _
        $region44: #{tpu_custom_call.1} parent=11 // pred_fallthru
          _
      $region12: #{tpu_custom_call.1} parent=5 // pred_fallthru
        _
      %p326 = scmp.lt.s32.totalorder %s23, 2
      // Predicated region
      $region45: #{tpu_custom_call.1} parent=5 // pred_check
        %p327 = pneg %p326
      $region46: #{tpu_custom_call.1} parent=5 // pred_check_branch
        %329 = sbr.rel (%p327) target = $region48
      $region47: #{tpu_custom_call.1} parent=5 // pred_region
        // Predicated region
        $region49: #{tpu_custom_call.1} parent=47 // pred_check
          %p330 = pneg %p43
        $region50: #{tpu_custom_call.1} parent=47 // pred_check_branch
          %332 = sbr.rel (%p330) target = $region52
        $region51: #{tpu_custom_call.1} parent=47 // pred_region
          %s333 = sand.u32 %s33, 1
          %s334 = scalar_lea.sflag [#allocation3], %s333
          %s335 = sand.u32 %s33, 1
          %s336 = smul.addr %s335, 128
          %s337 = scalar_lea.vmem [#allocation2], %s336
          %s338 = smul.u32 32, %s23
          %340 = vsyncadd %s334, 0
          %s341 = smul.addr %s338, 4
          %s342 = scalar_lea.hbm %s0, %s341
          %s343 = sshll.u32 %s342, 4
          %s344 = int_to_ptr.hbm [resolvable:$true] %s343
          %s345 = sshll.u32 %s337, 4
          %s346 = int_to_ptr.vmem [resolvable:$true] %s345
          %351 = dma.hbm_to_vmem [thread:$0]  %s344, 2048, %s346, %s334, 64, 64, 4
        $region52: #{tpu_custom_call.1} parent=47 // pred_fallthru
          _
      $region48: #{tpu_custom_call.1} parent=5 // pred_fallthru
        _
      %p352 = scmp.le.s32.totalorder 1, %s23
      %p353 = scmp.lt.s32.totalorder %s23, 3
      %p354 = pnand %p352, %p353
      %p355 = pneg %p354
      // Predicated region
      $region53: #{tpu_custom_call.1} parent=5 // pred_check
        _
      $region54: #{tpu_custom_call.1} parent=5 // pred_check_branch
        %357 = sbr.rel (%p354) target = $region56
      $region55: #{tpu_custom_call.1} parent=5 // pred_region
        %s358 = ssub.s32 %s23, 1
        %s359 = sand.u32 %s36, 1
        %s360 = scalar_lea.sflag [#allocation3], %s359
        %s361 = sand.u32 %s36, 1
        %s362 = smul.addr %s361, 128
        %s363 = scalar_lea.vmem [#allocation2], %s362
        // Predicated region
        $region57: #{tpu_custom_call.1} parent=55 // pred_check
          %p364 = pneg %p49
        $region58: #{tpu_custom_call.1} parent=55 // pred_check_branch
          %366 = sbr.rel (%p364) target = $region60
        $region59: #{tpu_custom_call.1} parent=55 // pred_region
          %368 = dma.done %s360, 2048
        $region60: #{tpu_custom_call.1} parent=55 // pred_fallthru
          _
        // Predicated region
        $region61: #{tpu_custom_call.1} parent=55 // pred_check
          %p369 = pneg %p70
        $region62: #{tpu_custom_call.1} parent=55 // pred_check_branch
          %371 = sbr.rel (%p369) target = $region64
        $region63: #{tpu_custom_call.1} parent=55 // pred_region
          %373 = dma.done [#allocation6], 1024
        $region64: #{tpu_custom_call.1} parent=55 // pred_fallthru
          _
        // Predicated region
        $region65: #{tpu_custom_call.1} parent=55 // pred_check
          %p374 = pneg %p112
        $region66: #{tpu_custom_call.1} parent=55 // pred_check_branch
          %376 = sbr.rel (%p374) target = $region68
        $region67: #{tpu_custom_call.1} parent=55 // pred_region
          %378 = dma.done [#allocation6], 1024
        $region68: #{tpu_custom_call.1} parent=55 // pred_fallthru
          _
        // Predicated region
        $region69: #{tpu_custom_call.1} parent=55 // pred_check
          %p379 = pneg %p154
        $region70: #{tpu_custom_call.1} parent=55 // pred_check_branch
          %381 = sbr.rel (%p379) target = $region72
        $region71: #{tpu_custom_call.1} parent=55 // pred_region
          %383 = dma.done [#allocation9], 1024
        $region72: #{tpu_custom_call.1} parent=55 // pred_fallthru
          _
        // Predicated region
        $region73: #{tpu_custom_call.1} parent=55 // pred_check
          %p384 = pneg %p196
        $region74: #{tpu_custom_call.1} parent=55 // pred_check_branch
          %386 = sbr.rel (%p384) target = $region76
        $region75: #{tpu_custom_call.1} parent=55 // pred_region
          %388 = dma.done [#allocation9], 1024
        $region76: #{tpu_custom_call.1} parent=55 // pred_fallthru
          _
        %s389 = sand.u32 %s36, 1
        %s390 = scalar_lea.sflag [#allocation3], %s389
        %s391 = sand.u32 %s36, 1
        %s392 = smul.addr %s391, 128
        %s393 = scalar_lea.vmem [#allocation2], %s392
        %p394 = pneg %p49
        %p395 = pneg %p46
        %p396 = pneg %p70
        %p397 = pneg %p67
        %p398 = pneg %p91
        %p399 = pneg %p88
        %p400 = pneg %p112
        %p401 = pneg %p109
        %p402 = pneg %p133
        %p403 = pneg %p130
        %p404 = pneg %p154
        %p405 = pneg %p151
        %p406 = pneg %p175
        %p407 = pneg %p172
        %p408 = pneg %p196
        %p409 = pneg %p193
        %p410 = pneg %p217
        %p411 = pneg %p214
        %p412 = pneg %p243
        %p413 = pneg %p240
        %s414 = sand.u32 %s230, 1
        %s415 = scalar_lea.sflag [#allocation4], %s414
        %s416 = sand.u32 %s230, 1
        %s417 = smul.addr %s416, 256
        %s418 = scalar_lea.vmem [#allocation11], %s417
        %s419 = smul.u32 32, %s28
        %s420 = smul.u32 32, %s28
        %v421 = vld [vmem:[%s363] sm:$0xf]
        %v422 = vld [vmem:[%s363 + $0x4] sm:$0xf]
        %v423 = vld [vmem:[%s363 + $0x8] sm:$0xf]
        %v424 = vld [vmem:[%s363 + $0xc] sm:$0xf]
        %v425 = vld [vmem:[%s363 + $0x10] sm:$0xf]
        %v426 = vld [vmem:[%s363 + $0x14] sm:$0xf]
        %v427 = vld [vmem:[%s363 + $0x18] sm:$0xf]
        %v428 = vld [vmem:[%s363 + $0x1c] sm:$0xf]
        %v429 = vld [vmem:[%s363 + $0x20] sm:$0xf]
        %v430 = vld [vmem:[%s363 + $0x24] sm:$0xf]
        %v431 = vld [vmem:[%s363 + $0x28] sm:$0xf]
        %v432 = vld [vmem:[%s363 + $0x2c] sm:$0xf]
        %v433 = vld [vmem:[%s363 + $0x30] sm:$0xf]
        %v434 = vld [vmem:[%s363 + $0x34] sm:$0xf]
        %v435 = vld [vmem:[%s363 + $0x38] sm:$0xf]
        %v436 = vld [vmem:[%s363 + $0x3c] sm:$0xf]
        %v437 = vld [vmem:[%s363 + $0x40] sm:$0xf]
        %v438 = vld [vmem:[%s363 + $0x44] sm:$0xf]
        %v439 = vld [vmem:[%s363 + $0x48] sm:$0xf]
        %v440 = vld [vmem:[%s363 + $0x4c] sm:$0xf]
        %v441 = vld [vmem:[%s363 + $0x50] sm:$0xf]
        %v442 = vld [vmem:[%s363 + $0x54] sm:$0xf]
        %v443 = vld [vmem:[%s363 + $0x58] sm:$0xf]
        %v444 = vld [vmem:[%s363 + $0x5c] sm:$0xf]
        %v445 = vld [vmem:[%s363 + $0x60] sm:$0xf]
        %v446 = vld [vmem:[%s363 + $0x64] sm:$0xf]
        %v447 = vld [vmem:[%s363 + $0x68] sm:$0xf]
        %v448 = vld [vmem:[%s363 + $0x6c] sm:$0xf]
        %v449 = vld [vmem:[%s363 + $0x70] sm:$0xf]
        %v450 = vld [vmem:[%s363 + $0x74] sm:$0xf]
        %v451 = vld [vmem:[%s363 + $0x78] sm:$0xf]
        %v452 = vld [vmem:[%s363 + $0x7c] sm:$0xf]
        %v453 = vld [vmem:[#allocation5] sm:$0xf]
        %v454 = vld [vmem:[#allocation5 + $0x4] sm:$0xf]
        %v455 = vld [vmem:[#allocation5 + $0x8] sm:$0xf]
        %v456 = vld [vmem:[#allocation5 + $0xc] sm:$0xf]
        %v457 = vld [vmem:[#allocation5 + $0x10] sm:$0xf]
        %v458 = vld [vmem:[#allocation5 + $0x14] sm:$0xf]
        %v459 = vld [vmem:[#allocation5 + $0x18] sm:$0xf]
        %v460 = vld [vmem:[#allocation5 + $0x1c] sm:$0xf]
        %v461 = vld [vmem:[#allocation5 + $0x20] sm:$0xf]
        %v462 = vld [vmem:[#allocation5 + $0x24] sm:$0xf]
        %v463 = vld [vmem:[#allocation5 + $0x28] sm:$0xf]
        %v464 = vld [vmem:[#allocation5 + $0x2c] sm:$0xf]
        %v465 = vld [vmem:[#allocation5 + $0x30] sm:$0xf]
        %v466 = vld [vmem:[#allocation5 + $0x34] sm:$0xf]
        %v467 = vld [vmem:[#allocation5 + $0x38] sm:$0xf]
        %v468 = vld [vmem:[#allocation5 + $0x3c] sm:$0xf]
        %v469 = vld [vmem:[%s2] sm:$0x1]
        %v471 = vperm.slane %v469, 0
        %v505 = vunpack.c.l.b16 %v421
        %v506 = vunpack.c.l.b16 %v422
        %v507 = vunpack.c.l.b16 %v423
        %v508 = vunpack.c.l.b16 %v424
        %v509 = vunpack.c.l.b16 %v425
        %v510 = vunpack.c.l.b16 %v426
        %v511 = vunpack.c.l.b16 %v427
        %v512 = vunpack.c.l.b16 %v428
        %v513 = vunpack.c.l.b16 %v429
        %v514 = vunpack.c.l.b16 %v430
        %v515 = vunpack.c.l.b16 %v431
        %v516 = vunpack.c.l.b16 %v432
        %v517 = vunpack.c.l.b16 %v433
        %v518 = vunpack.c.l.b16 %v434
        %v519 = vunpack.c.l.b16 %v435
        %v520 = vunpack.c.l.b16 %v436
        %v521 = vunpack.c.l.b16 %v437
        %v522 = vunpack.c.l.b16 %v438
        %v523 = vunpack.c.l.b16 %v439
        %v524 = vunpack.c.l.b16 %v440
        %v525 = vunpack.c.l.b16 %v441
        %v526 = vunpack.c.l.b16 %v442
        %v527 = vunpack.c.l.b16 %v443
        %v528 = vunpack.c.l.b16 %v444
        %v529 = vunpack.c.l.b16 %v445
        %v530 = vunpack.c.l.b16 %v446
        %v531 = vunpack.c.l.b16 %v447
        %v532 = vunpack.c.l.b16 %v448
        %v533 = vunpack.c.l.b16 %v449
        %v534 = vunpack.c.l.b16 %v450
        %v535 = vunpack.c.l.b16 %v451
        %v536 = vunpack.c.l.b16 %v452
        %v537 = vpack.c.b16 %v506, %v505
        %v538 = vpack.c.b16 %v508, %v507
        %v539 = vpack.c.b16 %v510, %v509
        %v540 = vpack.c.b16 %v512, %v511
        %v541 = vpack.c.b16 %v514, %v513
        %v542 = vpack.c.b16 %v516, %v515
        %v543 = vpack.c.b16 %v518, %v517
        %v544 = vpack.c.b16 %v520, %v519
        %v545 = vpack.c.b16 %v522, %v521
        %v546 = vpack.c.b16 %v524, %v523
        %v547 = vpack.c.b16 %v526, %v525
        %v548 = vpack.c.b16 %v528, %v527
        %v549 = vpack.c.b16 %v530, %v529
        %v550 = vpack.c.b16 %v532, %v531
        %v551 = vpack.c.b16 %v534, %v533
        %v552 = vpack.c.b16 %v536, %v535
        %v585 = vunpack.c.l.b16 %v453
        %v586 = vunpack.c.l.b16 %v454
        %v587 = vunpack.c.l.b16 %v455
        %v588 = vunpack.c.l.b16 %v456
        %v589 = vunpack.c.l.b16 %v457
        %v590 = vunpack.c.l.b16 %v458
        %v591 = vunpack.c.l.b16 %v459
        %v592 = vunpack.c.l.b16 %v460
        %v593 = vunpack.c.l.b16 %v461
        %v594 = vunpack.c.l.b16 %v462
        %v595 = vunpack.c.l.b16 %v463
        %v596 = vunpack.c.l.b16 %v464
        %v597 = vunpack.c.l.b16 %v465
        %v598 = vunpack.c.l.b16 %v466
        %v599 = vunpack.c.l.b16 %v467
        %v600 = vunpack.c.l.b16 %v468
        %v601 = vpack.c.b16 %v586, %v585
        %v602 = vpack.c.b16 %v588, %v587
        %v603 = vpack.c.b16 %v590, %v589
        %v604 = vpack.c.b16 %v592, %v591
        %v605 = vpack.c.b16 %v594, %v593
        %v606 = vpack.c.b16 %v596, %v595
        %v607 = vpack.c.b16 %v598, %v597
        %v608 = vpack.c.b16 %v600, %v599
        %617 = vmatpush.bf16.msra.mxu0 %v608
        %618 = vmatpush.bf16.msra.mxu0 %v607
        %619 = vmatpush.bf16.msra.mxu0 %v606
        %620 = vmatpush.bf16.msra.mxu0 %v605
        %621 = vmatpush.bf16.msra.mxu0 %v604
        %622 = vmatpush.bf16.msra.mxu0 %v603
        %623 = vmatpush.bf16.msra.mxu0 %v602
        %624 = vmatpush.bf16.msra.mxu0 %v601
        %625 = vmatmul.bf16.gmra.mxu0 %v537
        %v626 = vpop.f32.mrf.mxu0
        %v627 = vadd.f32 %v471, %v626
        %v628 = vpop.f32.mrf.mxu0
        %v629 = vadd.f32 %v471, %v628
        %630 = vmatmul.bf16.gmra.mxu0 %v538
        %v631 = vpop.f32.mrf.mxu0
        %v632 = vadd.f32 %v471, %v631
        %v633 = vpop.f32.mrf.mxu0
        %v634 = vadd.f32 %v471, %v633
        %635 = vmatmul.bf16.gmra.mxu0 %v539
        %v636 = vpop.f32.mrf.mxu0
        %v637 = vadd.f32 %v471, %v636
        %v638 = vpop.f32.mrf.mxu0
        %v639 = vadd.f32 %v471, %v638
        %640 = vmatmul.bf16.gmra.mxu0 %v540
        %v641 = vpop.f32.mrf.mxu0
        %v642 = vadd.f32 %v471, %v641
        %v643 = vpop.f32.mrf.mxu0
        %v644 = vadd.f32 %v471, %v643
        %645 = vmatmul.bf16.gmra.mxu0 %v541
        %v646 = vpop.f32.mrf.mxu0
        %v647 = vadd.f32 %v471, %v646
        %v648 = vpop.f32.mrf.mxu0
        %v649 = vadd.f32 %v471, %v648
        %650 = vmatmul.bf16.gmra.mxu0 %v542
        %v651 = vpop.f32.mrf.mxu0
        %v652 = vadd.f32 %v471, %v651
        %v653 = vpop.f32.mrf.mxu0
        %v654 = vadd.f32 %v471, %v653
        %655 = vmatmul.bf16.gmra.mxu0 %v543
        %v656 = vpop.f32.mrf.mxu0
        %v657 = vadd.f32 %v471, %v656
        %v658 = vpop.f32.mrf.mxu0
        %v659 = vadd.f32 %v471, %v658
        %660 = vmatmul.bf16.gmra.mxu0 %v544
        %v661 = vpop.f32.mrf.mxu0
        %v662 = vadd.f32 %v471, %v661
        %v663 = vpop.f32.mrf.mxu0
        %v664 = vadd.f32 %v471, %v663
        %665 = vmatmul.bf16.gmra.mxu0 %v545
        %v666 = vpop.f32.mrf.mxu0
        %v667 = vadd.f32 %v471, %v666
        %v668 = vpop.f32.mrf.mxu0
        %v669 = vadd.f32 %v471, %v668
        %670 = vmatmul.bf16.gmra.mxu0 %v546
        %v671 = vpop.f32.mrf.mxu0
        %v672 = vadd.f32 %v471, %v671
        %v673 = vpop.f32.mrf.mxu0
        %v674 = vadd.f32 %v471, %v673
        %675 = vmatmul.bf16.gmra.mxu0 %v547
        %v676 = vpop.f32.mrf.mxu0
        %v677 = vadd.f32 %v471, %v676
        %v678 = vpop.f32.mrf.mxu0
        %v679 = vadd.f32 %v471, %v678
        %680 = vmatmul.bf16.gmra.mxu0 %v548
        %v681 = vpop.f32.mrf.mxu0
        %v682 = vadd.f32 %v471, %v681
        %v683 = vpop.f32.mrf.mxu0
        %v684 = vadd.f32 %v471, %v683
        %685 = vmatmul.bf16.gmra.mxu0 %v549
        %v686 = vpop.f32.mrf.mxu0
        %v687 = vadd.f32 %v471, %v686
        %v688 = vpop.f32.mrf.mxu0
        %v689 = vadd.f32 %v471, %v688
        %690 = vmatmul.bf16.gmra.mxu0 %v550
        %v691 = vpop.f32.mrf.mxu0
        %v692 = vadd.f32 %v471, %v691
        %v693 = vpop.f32.mrf.mxu0
        %v694 = vadd.f32 %v471, %v693
        %695 = vmatmul.bf16.gmra.mxu0 %v551
        %v696 = vpop.f32.mrf.mxu0
        %v697 = vadd.f32 %v471, %v696
        %v698 = vpop.f32.mrf.mxu0
        %v699 = vadd.f32 %v471, %v698
        %700 = vmatmul.bf16.gmra.mxu0 %v552
        %v701 = vpop.f32.mrf.mxu0
        %v702 = vadd.f32 %v471, %v701
        %v703 = vpop.f32.mrf.mxu0
        %v704 = vadd.f32 %v471, %v703
        %705 = vdwg.mxu0
        %v706 = vxor.u32 %v627, 2147483648
        %v707 = vxor.u32 %v629, 2147483648
        %v708 = vxor.u32 %v632, 2147483648
        %v709 = vxor.u32 %v634, 2147483648
        %v710 = vxor.u32 %v637, 2147483648
        %v711 = vxor.u32 %v639, 2147483648
        %v712 = vxor.u32 %v642, 2147483648
        %v713 = vxor.u32 %v644, 2147483648
        %v714 = vxor.u32 %v647, 2147483648
        %v715 = vxor.u32 %v649, 2147483648
        %v716 = vxor.u32 %v652, 2147483648
        %v717 = vxor.u32 %v654, 2147483648
        %v718 = vxor.u32 %v657, 2147483648
        %v719 = vxor.u32 %v659, 2147483648
        %v720 = vxor.u32 %v662, 2147483648
        %v721 = vxor.u32 %v664, 2147483648
        %v722 = vxor.u32 %v667, 2147483648
        %v723 = vxor.u32 %v669, 2147483648
        %v724 = vxor.u32 %v672, 2147483648
        %v725 = vxor.u32 %v674, 2147483648
        %v726 = vxor.u32 %v677, 2147483648
        %v727 = vxor.u32 %v679, 2147483648
        %v728 = vxor.u32 %v682, 2147483648
        %v729 = vxor.u32 %v684, 2147483648
        %v730 = vxor.u32 %v687, 2147483648
        %v731 = vxor.u32 %v689, 2147483648
        %v732 = vxor.u32 %v692, 2147483648
        %v733 = vxor.u32 %v694, 2147483648
        %v734 = vxor.u32 %v697, 2147483648
        %v735 = vxor.u32 %v699, 2147483648
        %v736 = vxor.u32 %v702, 2147483648
        %v737 = vxor.u32 %v704, 2147483648
        %v738 = vmul.f32 %v706, 1.442695
        %v739 = vpow.pop %v738
        %v740 = vmul.f32 %v707, 1.442695
        %v741 = vpow.pop %v740
        %v742 = vmul.f32 %v708, 1.442695
        %v743 = vpow.pop %v742
        %v744 = vmul.f32 %v709, 1.442695
        %v745 = vpow.pop %v744
        %v746 = vmul.f32 %v710, 1.442695
        %v747 = vpow.pop %v746
        %v748 = vmul.f32 %v711, 1.442695
        %v749 = vpow.pop %v748
        %v750 = vmul.f32 %v712, 1.442695
        %v751 = vpow.pop %v750
        %v752 = vmul.f32 %v713, 1.442695
        %v753 = vpow.pop %v752
        %v754 = vmul.f32 %v714, 1.442695
        %v755 = vpow.pop %v754
        %v756 = vmul.f32 %v715, 1.442695
        %v757 = vpow.pop %v756
        %v758 = vmul.f32 %v716, 1.442695
        %v759 = vpow.pop %v758
        %v760 = vmul.f32 %v717, 1.442695
        %v761 = vpow.pop %v760
        %v762 = vmul.f32 %v718, 1.442695
        %v763 = vpow.pop %v762
        %v764 = vmul.f32 %v719, 1.442695
        %v765 = vpow.pop %v764
        %v766 = vmul.f32 %v720, 1.442695
        %v767 = vpow.pop %v766
        %v768 = vmul.f32 %v721, 1.442695
        %v769 = vpow.pop %v768
        %v770 = vmul.f32 %v722, 1.442695
        %v771 = vpow.pop %v770
        %v772 = vmul.f32 %v723, 1.442695
        %v773 = vpow.pop %v772
        %v774 = vmul.f32 %v724, 1.442695
        %v775 = vpow.pop %v774
        %v776 = vmul.f32 %v725, 1.442695
        %v777 = vpow.pop %v776
        %v778 = vmul.f32 %v726, 1.442695
        %v779 = vpow.pop %v778
        %v780 = vmul.f32 %v727, 1.442695
        %v781 = vpow.pop %v780
        %v782 = vmul.f32 %v728, 1.442695
        %v783 = vpow.pop %v782
        %v784 = vmul.f32 %v729, 1.442695
        %v785 = vpow.pop %v784
        %v786 = vmul.f32 %v730, 1.442695
        %v787 = vpow.pop %v786
        %v788 = vmul.f32 %v731, 1.442695
        %v789 = vpow.pop %v788
        %v790 = vmul.f32 %v732, 1.442695
        %v791 = vpow.pop %v790
        %v792 = vmul.f32 %v733, 1.442695
        %v793 = vpow.pop %v792
        %v794 = vmul.f32 %v734, 1.442695
        %v795 = vpow.pop %v794
        %v796 = vmul.f32 %v735, 1.442695
        %v797 = vpow.pop %v796
        %v798 = vmul.f32 %v736, 1.442695
        %v799 = vpow.pop %v798
        %v800 = vmul.f32 %v737, 1.442695
        %v801 = vpow.pop %v800
        %v802 = vadd.f32 %v739, 1.0
        %v803 = vadd.f32 %v741, 1.0
        %v804 = vadd.f32 %v743, 1.0
        %v805 = vadd.f32 %v745, 1.0
        %v806 = vadd.f32 %v747, 1.0
        %v807 = vadd.f32 %v749, 1.0
        %v808 = vadd.f32 %v751, 1.0
        %v809 = vadd.f32 %v753, 1.0
        %v810 = vadd.f32 %v755, 1.0
        %v811 = vadd.f32 %v757, 1.0
        %v812 = vadd.f32 %v759, 1.0
        %v813 = vadd.f32 %v761, 1.0
        %v814 = vadd.f32 %v763, 1.0
        %v815 = vadd.f32 %v765, 1.0
        %v816 = vadd.f32 %v767, 1.0
        %v817 = vadd.f32 %v769, 1.0
        %v818 = vadd.f32 %v771, 1.0
        %v819 = vadd.f32 %v773, 1.0
        %v820 = vadd.f32 %v775, 1.0
        %v821 = vadd.f32 %v777, 1.0
        %v822 = vadd.f32 %v779, 1.0
        %v823 = vadd.f32 %v781, 1.0
        %v824 = vadd.f32 %v783, 1.0
        %v825 = vadd.f32 %v785, 1.0
        %v826 = vadd.f32 %v787, 1.0
        %v827 = vadd.f32 %v789, 1.0
        %v828 = vadd.f32 %v791, 1.0
        %v829 = vadd.f32 %v793, 1.0
        %v830 = vadd.f32 %v795, 1.0
        %v831 = vadd.f32 %v797, 1.0
        %v832 = vadd.f32 %v799, 1.0
        %v833 = vadd.f32 %v801, 1.0
        %v834 = vrcp.pop %v802
        %v835 = vmul.f32 %v802, %v834
        %v836 = vsub.f32 1.0, %v835
        %v837 = vmul.f32 %v834, %v836
        %v838 = vadd.f32 %v834, %v837
        %vm839 = vweird.f32 %v802
        %vm840 = vweird.f32 %v834
        %vm841 = vmor %vm839, %vm840
        %v842 = vsel %vm841, %v834, %v838
        %v843 = vand.u32 2147483647, %v802
        %vm844 = vcmp.eq.f32.partialorder %v843, 8.507059e+37
        %v845 = vand.u32 %v802, 2147483648
        %v846 = vor.u32 1.1754944e-38, %v845
        %v847 = vsel %vm844, %v846, %v842
        %v848 = vmul.f32 1.0, %v847
        %v849 = vrcp.pop %v803
        %v850 = vmul.f32 %v803, %v849
        %v851 = vsub.f32 1.0, %v850
        %v852 = vmul.f32 %v849, %v851
        %v853 = vadd.f32 %v849, %v852
        %vm854 = vweird.f32 %v803
        %vm855 = vweird.f32 %v849
        %vm856 = vmor %vm854, %vm855
        %v857 = vsel %vm856, %v849, %v853
        %v858 = vand.u32 2147483647, %v803
        %vm859 = vcmp.eq.f32.partialorder %v858, 8.507059e+37
        %v860 = vand.u32 %v803, 2147483648
        %v861 = vor.u32 1.1754944e-38, %v860
        %v862 = vsel %vm859, %v861, %v857
        %v863 = vmul.f32 1.0, %v862
        %v864 = vrcp.pop %v804
        %v865 = vmul.f32 %v804, %v864
        %v866 = vsub.f32 1.0, %v865
        %v867 = vmul.f32 %v864, %v866
        %v868 = vadd.f32 %v864, %v867
        %vm869 = vweird.f32 %v804
        %vm870 = vweird.f32 %v864
        %vm871 = vmor %vm869, %vm870
        %v872 = vsel %vm871, %v864, %v868
        %v873 = vand.u32 2147483647, %v804
        %vm874 = vcmp.eq.f32.partialorder %v873, 8.507059e+37
        %v875 = vand.u32 %v804, 2147483648
        %v876 = vor.u32 1.1754944e-38, %v875
        %v877 = vsel %vm874, %v876, %v872
        %v878 = vmul.f32 1.0, %v877
        %v879 = vrcp.pop %v805
        %v880 = vmul.f32 %v805, %v879
        %v881 = vsub.f32 1.0, %v880
        %v882 = vmul.f32 %v879, %v881
        %v883 = vadd.f32 %v879, %v882
        %vm884 = vweird.f32 %v805
        %vm885 = vweird.f32 %v879
        %vm886 = vmor %vm884, %vm885
        %v887 = vsel %vm886, %v879, %v883
        %v888 = vand.u32 2147483647, %v805
        %vm889 = vcmp.eq.f32.partialorder %v888, 8.507059e+37
        %v890 = vand.u32 %v805, 2147483648
        %v891 = vor.u32 1.1754944e-38, %v890
        %v892 = vsel %vm889, %v891, %v887
        %v893 = vmul.f32 1.0, %v892
        %v894 = vrcp.pop %v806
        %v895 = vmul.f32 %v806, %v894
        %v896 = vsub.f32 1.0, %v895
        %v897 = vmul.f32 %v894, %v896
        %v898 = vadd.f32 %v894, %v897
        %vm899 = vweird.f32 %v806
        %vm900 = vweird.f32 %v894
        %vm901 = vmor %vm899, %vm900
        %v902 = vsel %vm901, %v894, %v898
        %v903 = vand.u32 2147483647, %v806
        %vm904 = vcmp.eq.f32.partialorder %v903, 8.507059e+37
        %v905 = vand.u32 %v806, 2147483648
        %v906 = vor.u32 1.1754944e-38, %v905
        %v907 = vsel %vm904, %v906, %v902
        %v908 = vmul.f32 1.0, %v907
        %v909 = vrcp.pop %v807
        %v910 = vmul.f32 %v807, %v909
        %v911 = vsub.f32 1.0, %v910
        %v912 = vmul.f32 %v909, %v911
        %v913 = vadd.f32 %v909, %v912
        %vm914 = vweird.f32 %v807
        %vm915 = vweird.f32 %v909
        %vm916 = vmor %vm914, %vm915
        %v917 = vsel %vm916, %v909, %v913
        %v918 = vand.u32 2147483647, %v807
        %vm919 = vcmp.eq.f32.partialorder %v918, 8.507059e+37
        %v920 = vand.u32 %v807, 2147483648
        %v921 = vor.u32 1.1754944e-38, %v920
        %v922 = vsel %vm919, %v921, %v917
        %v923 = vmul.f32 1.0, %v922
        %v924 = vrcp.pop %v808
        %v925 = vmul.f32 %v808, %v924
        %v926 = vsub.f32 1.0, %v925
        %v927 = vmul.f32 %v924, %v926
        %v928 = vadd.f32 %v924, %v927
        %vm929 = vweird.f32 %v808
        %vm930 = vweird.f32 %v924
        %vm931 = vmor %vm929, %vm930
        %v932 = vsel %vm931, %v924, %v928
        %v933 = vand.u32 2147483647, %v808
        %vm934 = vcmp.eq.f32.partialorder %v933, 8.507059e+37
        %v935 = vand.u32 %v808, 2147483648
        %v936 = vor.u32 1.1754944e-38, %v935
        %v937 = vsel %vm934, %v936, %v932
        %v938 = vmul.f32 1.0, %v937
        %v939 = vrcp.pop %v809
        %v940 = vmul.f32 %v809, %v939
        %v941 = vsub.f32 1.0, %v940
        %v942 = vmul.f32 %v939, %v941
        %v943 = vadd.f32 %v939, %v942
        %vm944 = vweird.f32 %v809
        %vm945 = vweird.f32 %v939
        %vm946 = vmor %vm944, %vm945
        %v947 = vsel %vm946, %v939, %v943
        %v948 = vand.u32 2147483647, %v809
        %vm949 = vcmp.eq.f32.partialorder %v948, 8.507059e+37
        %v950 = vand.u32 %v809, 2147483648
        %v951 = vor.u32 1.1754944e-38, %v950
        %v952 = vsel %vm949, %v951, %v947
        %v953 = vmul.f32 1.0, %v952
        %v954 = vrcp.pop %v810
        %v955 = vmul.f32 %v810, %v954
        %v956 = vsub.f32 1.0, %v955
        %v957 = vmul.f32 %v954, %v956
        %v958 = vadd.f32 %v954, %v957
        %vm959 = vweird.f32 %v810
        %vm960 = vweird.f32 %v954
        %vm961 = vmor %vm959, %vm960
        %v962 = vsel %vm961, %v954, %v958
        %v963 = vand.u32 2147483647, %v810
        %vm964 = vcmp.eq.f32.partialorder %v963, 8.507059e+37
        %v965 = vand.u32 %v810, 2147483648
        %v966 = vor.u32 1.1754944e-38, %v965
        %v967 = vsel %vm964, %v966, %v962
        %v968 = vmul.f32 1.0, %v967
        %v969 = vrcp.pop %v811
        %v970 = vmul.f32 %v811, %v969
        %v971 = vsub.f32 1.0, %v970
        %v972 = vmul.f32 %v969, %v971
        %v973 = vadd.f32 %v969, %v972
        %vm974 = vweird.f32 %v811
        %vm975 = vweird.f32 %v969
        %vm976 = vmor %vm974, %vm975
        %v977 = vsel %vm976, %v969, %v973
        %v978 = vand.u32 2147483647, %v811
        %vm979 = vcmp.eq.f32.partialorder %v978, 8.507059e+37
        %v980 = vand.u32 %v811, 2147483648
        %v981 = vor.u32 1.1754944e-38, %v980
        %v982 = vsel %vm979, %v981, %v977
        %v983 = vmul.f32 1.0, %v982
        %v984 = vrcp.pop %v812
        %v985 = vmul.f32 %v812, %v984
        %v986 = vsub.f32 1.0, %v985
        %v987 = vmul.f32 %v984, %v986
        %v988 = vadd.f32 %v984, %v987
        %vm989 = vweird.f32 %v812
        %vm990 = vweird.f32 %v984
        %vm991 = vmor %vm989, %vm990
        %v992 = vsel %vm991, %v984, %v988
        %v993 = vand.u32 2147483647, %v812
        %vm994 = vcmp.eq.f32.partialorder %v993, 8.507059e+37
        %v995 = vand.u32 %v812, 2147483648
        %v996 = vor.u32 1.1754944e-38, %v995
        %v997 = vsel %vm994, %v996, %v992
        %v998 = vmul.f32 1.0, %v997
        %v999 = vrcp.pop %v813
        %v1000 = vmul.f32 %v813, %v999
        %v1001 = vsub.f32 1.0, %v1000
        %v1002 = vmul.f32 %v999, %v1001
        %v1003 = vadd.f32 %v999, %v1002
        %vm1004 = vweird.f32 %v813
        %vm1005 = vweird.f32 %v999
        %vm1006 = vmor %vm1004, %vm1005
        %v1007 = vsel %vm1006, %v999, %v1003
        %v1008 = vand.u32 2147483647, %v813
        %vm1009 = vcmp.eq.f32.partialorder %v1008, 8.507059e+37
        %v1010 = vand.u32 %v813, 2147483648
        %v1011 = vor.u32 1.1754944e-38, %v1010
        %v1012 = vsel %vm1009, %v1011, %v1007
        %v1013 = vmul.f32 1.0, %v1012
        %v1014 = vrcp.pop %v814
        %v1015 = vmul.f32 %v814, %v1014
        %v1016 = vsub.f32 1.0, %v1015
        %v1017 = vmul.f32 %v1014, %v1016
        %v1018 = vadd.f32 %v1014, %v1017
        %vm1019 = vweird.f32 %v814
        %vm1020 = vweird.f32 %v1014
        %vm1021 = vmor %vm1019, %vm1020
        %v1022 = vsel %vm1021, %v1014, %v1018
        %v1023 = vand.u32 2147483647, %v814
        %vm1024 = vcmp.eq.f32.partialorder %v1023, 8.507059e+37
        %v1025 = vand.u32 %v814, 2147483648
        %v1026 = vor.u32 1.1754944e-38, %v1025
        %v1027 = vsel %vm1024, %v1026, %v1022
        %v1028 = vmul.f32 1.0, %v1027
        %v1029 = vrcp.pop %v815
        %v1030 = vmul.f32 %v815, %v1029
        %v1031 = vsub.f32 1.0, %v1030
        %v1032 = vmul.f32 %v1029, %v1031
        %v1033 = vadd.f32 %v1029, %v1032
        %vm1034 = vweird.f32 %v815
        %vm1035 = vweird.f32 %v1029
        %vm1036 = vmor %vm1034, %vm1035
        %v1037 = vsel %vm1036, %v1029, %v1033
        %v1038 = vand.u32 2147483647, %v815
        %vm1039 = vcmp.eq.f32.partialorder %v1038, 8.507059e+37
        %v1040 = vand.u32 %v815, 2147483648
        %v1041 = vor.u32 1.1754944e-38, %v1040
        %v1042 = vsel %vm1039, %v1041, %v1037
        %v1043 = vmul.f32 1.0, %v1042
        %v1044 = vrcp.pop %v816
        %v1045 = vmul.f32 %v816, %v1044
        %v1046 = vsub.f32 1.0, %v1045
        %v1047 = vmul.f32 %v1044, %v1046
        %v1048 = vadd.f32 %v1044, %v1047
        %vm1049 = vweird.f32 %v816
        %vm1050 = vweird.f32 %v1044
        %vm1051 = vmor %vm1049, %vm1050
        %v1052 = vsel %vm1051, %v1044, %v1048
        %v1053 = vand.u32 2147483647, %v816
        %vm1054 = vcmp.eq.f32.partialorder %v1053, 8.507059e+37
        %v1055 = vand.u32 %v816, 2147483648
        %v1056 = vor.u32 1.1754944e-38, %v1055
        %v1057 = vsel %vm1054, %v1056, %v1052
        %v1058 = vmul.f32 1.0, %v1057
        %v1059 = vrcp.pop %v817
        %v1060 = vmul.f32 %v817, %v1059
        %v1061 = vsub.f32 1.0, %v1060
        %v1062 = vmul.f32 %v1059, %v1061
        %v1063 = vadd.f32 %v1059, %v1062
        %vm1064 = vweird.f32 %v817
        %vm1065 = vweird.f32 %v1059
        %vm1066 = vmor %vm1064, %vm1065
        %v1067 = vsel %vm1066, %v1059, %v1063
        %v1068 = vand.u32 2147483647, %v817
        %vm1069 = vcmp.eq.f32.partialorder %v1068, 8.507059e+37
        %v1070 = vand.u32 %v817, 2147483648
        %v1071 = vor.u32 1.1754944e-38, %v1070
        %v1072 = vsel %vm1069, %v1071, %v1067
        %v1073 = vmul.f32 1.0, %v1072
        %v1074 = vrcp.pop %v818
        %v1075 = vmul.f32 %v818, %v1074
        %v1076 = vsub.f32 1.0, %v1075
        %v1077 = vmul.f32 %v1074, %v1076
        %v1078 = vadd.f32 %v1074, %v1077
        %vm1079 = vweird.f32 %v818
        %vm1080 = vweird.f32 %v1074
        %vm1081 = vmor %vm1079, %vm1080
        %v1082 = vsel %vm1081, %v1074, %v1078
        %v1083 = vand.u32 2147483647, %v818
        %vm1084 = vcmp.eq.f32.partialorder %v1083, 8.507059e+37
        %v1085 = vand.u32 %v818, 2147483648
        %v1086 = vor.u32 1.1754944e-38, %v1085
        %v1087 = vsel %vm1084, %v1086, %v1082
        %v1088 = vmul.f32 1.0, %v1087
        %v1089 = vrcp.pop %v819
        %v1090 = vmul.f32 %v819, %v1089
        %v1091 = vsub.f32 1.0, %v1090
        %v1092 = vmul.f32 %v1089, %v1091
        %v1093 = vadd.f32 %v1089, %v1092
        %vm1094 = vweird.f32 %v819
        %vm1095 = vweird.f32 %v1089
        %vm1096 = vmor %vm1094, %vm1095
        %v1097 = vsel %vm1096, %v1089, %v1093
        %v1098 = vand.u32 2147483647, %v819
        %vm1099 = vcmp.eq.f32.partialorder %v1098, 8.507059e+37
        %v1100 = vand.u32 %v819, 2147483648
        %v1101 = vor.u32 1.1754944e-38, %v1100
        %v1102 = vsel %vm1099, %v1101, %v1097
        %v1103 = vmul.f32 1.0, %v1102
        %v1104 = vrcp.pop %v820
        %v1105 = vmul.f32 %v820, %v1104
        %v1106 = vsub.f32 1.0, %v1105
        %v1107 = vmul.f32 %v1104, %v1106
        %v1108 = vadd.f32 %v1104, %v1107
        %vm1109 = vweird.f32 %v820
        %vm1110 = vweird.f32 %v1104
        %vm1111 = vmor %vm1109, %vm1110
        %v1112 = vsel %vm1111, %v1104, %v1108
        %v1113 = vand.u32 2147483647, %v820
        %vm1114 = vcmp.eq.f32.partialorder %v1113, 8.507059e+37
        %v1115 = vand.u32 %v820, 2147483648
        %v1116 = vor.u32 1.1754944e-38, %v1115
        %v1117 = vsel %vm1114, %v1116, %v1112
        %v1118 = vmul.f32 1.0, %v1117
        %v1119 = vrcp.pop %v821
        %v1120 = vmul.f32 %v821, %v1119
        %v1121 = vsub.f32 1.0, %v1120
        %v1122 = vmul.f32 %v1119, %v1121
        %v1123 = vadd.f32 %v1119, %v1122
        %vm1124 = vweird.f32 %v821
        %vm1125 = vweird.f32 %v1119
        %vm1126 = vmor %vm1124, %vm1125
        %v1127 = vsel %vm1126, %v1119, %v1123
        %v1128 = vand.u32 2147483647, %v821
        %vm1129 = vcmp.eq.f32.partialorder %v1128, 8.507059e+37
        %v1130 = vand.u32 %v821, 2147483648
        %v1131 = vor.u32 1.1754944e-38, %v1130
        %v1132 = vsel %vm1129, %v1131, %v1127
        %v1133 = vmul.f32 1.0, %v1132
        %v1134 = vrcp.pop %v822
        %v1135 = vmul.f32 %v822, %v1134
        %v1136 = vsub.f32 1.0, %v1135
        %v1137 = vmul.f32 %v1134, %v1136
        %v1138 = vadd.f32 %v1134, %v1137
        %vm1139 = vweird.f32 %v822
        %vm1140 = vweird.f32 %v1134
        %vm1141 = vmor %vm1139, %vm1140
        %v1142 = vsel %vm1141, %v1134, %v1138
        %v1143 = vand.u32 2147483647, %v822
        %vm1144 = vcmp.eq.f32.partialorder %v1143, 8.507059e+37
        %v1145 = vand.u32 %v822, 2147483648
        %v1146 = vor.u32 1.1754944e-38, %v1145
        %v1147 = vsel %vm1144, %v1146, %v1142
        %v1148 = vmul.f32 1.0, %v1147
        %v1149 = vrcp.pop %v823
        %v1150 = vmul.f32 %v823, %v1149
        %v1151 = vsub.f32 1.0, %v1150
        %v1152 = vmul.f32 %v1149, %v1151
        %v1153 = vadd.f32 %v1149, %v1152
        %vm1154 = vweird.f32 %v823
        %vm1155 = vweird.f32 %v1149
        %vm1156 = vmor %vm1154, %vm1155
        %v1157 = vsel %vm1156, %v1149, %v1153
        %v1158 = vand.u32 2147483647, %v823
        %vm1159 = vcmp.eq.f32.partialorder %v1158, 8.507059e+37
        %v1160 = vand.u32 %v823, 2147483648
        %v1161 = vor.u32 1.1754944e-38, %v1160
        %v1162 = vsel %vm1159, %v1161, %v1157
        %v1163 = vmul.f32 1.0, %v1162
        %v1164 = vrcp.pop %v824
        %v1165 = vmul.f32 %v824, %v1164
        %v1166 = vsub.f32 1.0, %v1165
        %v1167 = vmul.f32 %v1164, %v1166
        %v1168 = vadd.f32 %v1164, %v1167
        %vm1169 = vweird.f32 %v824
        %vm1170 = vweird.f32 %v1164
        %vm1171 = vmor %vm1169, %vm1170
        %v1172 = vsel %vm1171, %v1164, %v1168
        %v1173 = vand.u32 2147483647, %v824
        %vm1174 = vcmp.eq.f32.partialorder %v1173, 8.507059e+37
        %v1175 = vand.u32 %v824, 2147483648
        %v1176 = vor.u32 1.1754944e-38, %v1175
        %v1177 = vsel %vm1174, %v1176, %v1172
        %v1178 = vmul.f32 1.0, %v1177
        %v1179 = vrcp.pop %v825
        %v1180 = vmul.f32 %v825, %v1179
        %v1181 = vsub.f32 1.0, %v1180
        %v1182 = vmul.f32 %v1179, %v1181
        %v1183 = vadd.f32 %v1179, %v1182
        %vm1184 = vweird.f32 %v825
        %vm1185 = vweird.f32 %v1179
        %vm1186 = vmor %vm1184, %vm1185
        %v1187 = vsel %vm1186, %v1179, %v1183
        %v1188 = vand.u32 2147483647, %v825
        %vm1189 = vcmp.eq.f32.partialorder %v1188, 8.507059e+37
        %v1190 = vand.u32 %v825, 2147483648
        %v1191 = vor.u32 1.1754944e-38, %v1190
        %v1192 = vsel %vm1189, %v1191, %v1187
        %v1193 = vmul.f32 1.0, %v1192
        %v1194 = vrcp.pop %v826
        %v1195 = vmul.f32 %v826, %v1194
        %v1196 = vsub.f32 1.0, %v1195
        %v1197 = vmul.f32 %v1194, %v1196
        %v1198 = vadd.f32 %v1194, %v1197
        %vm1199 = vweird.f32 %v826
        %vm1200 = vweird.f32 %v1194
        %vm1201 = vmor %vm1199, %vm1200
        %v1202 = vsel %vm1201, %v1194, %v1198
        %v1203 = vand.u32 2147483647, %v826
        %vm1204 = vcmp.eq.f32.partialorder %v1203, 8.507059e+37
        %v1205 = vand.u32 %v826, 2147483648
        %v1206 = vor.u32 1.1754944e-38, %v1205
        %v1207 = vsel %vm1204, %v1206, %v1202
        %v1208 = vmul.f32 1.0, %v1207
        %v1209 = vrcp.pop %v827
        %v1210 = vmul.f32 %v827, %v1209
        %v1211 = vsub.f32 1.0, %v1210
        %v1212 = vmul.f32 %v1209, %v1211
        %v1213 = vadd.f32 %v1209, %v1212
        %vm1214 = vweird.f32 %v827
        %vm1215 = vweird.f32 %v1209
        %vm1216 = vmor %vm1214, %vm1215
        %v1217 = vsel %vm1216, %v1209, %v1213
        %v1218 = vand.u32 2147483647, %v827
        %vm1219 = vcmp.eq.f32.partialorder %v1218, 8.507059e+37
        %v1220 = vand.u32 %v827, 2147483648
        %v1221 = vor.u32 1.1754944e-38, %v1220
        %v1222 = vsel %vm1219, %v1221, %v1217
        %v1223 = vmul.f32 1.0, %v1222
        %v1224 = vrcp.pop %v828
        %v1225 = vmul.f32 %v828, %v1224
        %v1226 = vsub.f32 1.0, %v1225
        %v1227 = vmul.f32 %v1224, %v1226
        %v1228 = vadd.f32 %v1224, %v1227
        %vm1229 = vweird.f32 %v828
        %vm1230 = vweird.f32 %v1224
        %vm1231 = vmor %vm1229, %vm1230
        %v1232 = vsel %vm1231, %v1224, %v1228
        %v1233 = vand.u32 2147483647, %v828
        %vm1234 = vcmp.eq.f32.partialorder %v1233, 8.507059e+37
        %v1235 = vand.u32 %v828, 2147483648
        %v1236 = vor.u32 1.1754944e-38, %v1235
        %v1237 = vsel %vm1234, %v1236, %v1232
        %v1238 = vmul.f32 1.0, %v1237
        %v1239 = vrcp.pop %v829
        %v1240 = vmul.f32 %v829, %v1239
        %v1241 = vsub.f32 1.0, %v1240
        %v1242 = vmul.f32 %v1239, %v1241
        %v1243 = vadd.f32 %v1239, %v1242
        %vm1244 = vweird.f32 %v829
        %vm1245 = vweird.f32 %v1239
        %vm1246 = vmor %vm1244, %vm1245
        %v1247 = vsel %vm1246, %v1239, %v1243
        %v1248 = vand.u32 2147483647, %v829
        %vm1249 = vcmp.eq.f32.partialorder %v1248, 8.507059e+37
        %v1250 = vand.u32 %v829, 2147483648
        %v1251 = vor.u32 1.1754944e-38, %v1250
        %v1252 = vsel %vm1249, %v1251, %v1247
        %v1253 = vmul.f32 1.0, %v1252
        %v1254 = vrcp.pop %v830
        %v1255 = vmul.f32 %v830, %v1254
        %v1256 = vsub.f32 1.0, %v1255
        %v1257 = vmul.f32 %v1254, %v1256
        %v1258 = vadd.f32 %v1254, %v1257
        %vm1259 = vweird.f32 %v830
        %vm1260 = vweird.f32 %v1254
        %vm1261 = vmor %vm1259, %vm1260
        %v1262 = vsel %vm1261, %v1254, %v1258
        %v1263 = vand.u32 2147483647, %v830
        %vm1264 = vcmp.eq.f32.partialorder %v1263, 8.507059e+37
        %v1265 = vand.u32 %v830, 2147483648
        %v1266 = vor.u32 1.1754944e-38, %v1265
        %v1267 = vsel %vm1264, %v1266, %v1262
        %v1268 = vmul.f32 1.0, %v1267
        %v1269 = vrcp.pop %v831
        %v1270 = vmul.f32 %v831, %v1269
        %v1271 = vsub.f32 1.0, %v1270
        %v1272 = vmul.f32 %v1269, %v1271
        %v1273 = vadd.f32 %v1269, %v1272
        %vm1274 = vweird.f32 %v831
        %vm1275 = vweird.f32 %v1269
        %vm1276 = vmor %vm1274, %vm1275
        %v1277 = vsel %vm1276, %v1269, %v1273
        %v1278 = vand.u32 2147483647, %v831
        %vm1279 = vcmp.eq.f32.partialorder %v1278, 8.507059e+37
        %v1280 = vand.u32 %v831, 2147483648
        %v1281 = vor.u32 1.1754944e-38, %v1280
        %v1282 = vsel %vm1279, %v1281, %v1277
        %v1283 = vmul.f32 1.0, %v1282
        %v1284 = vrcp.pop %v832
        %v1285 = vmul.f32 %v832, %v1284
        %v1286 = vsub.f32 1.0, %v1285
        %v1287 = vmul.f32 %v1284, %v1286
        %v1288 = vadd.f32 %v1284, %v1287
        %vm1289 = vweird.f32 %v832
        %vm1290 = vweird.f32 %v1284
        %vm1291 = vmor %vm1289, %vm1290
        %v1292 = vsel %vm1291, %v1284, %v1288
        %v1293 = vand.u32 2147483647, %v832
        %vm1294 = vcmp.eq.f32.partialorder %v1293, 8.507059e+37
        %v1295 = vand.u32 %v832, 2147483648
        %v1296 = vor.u32 1.1754944e-38, %v1295
        %v1297 = vsel %vm1294, %v1296, %v1292
        %v1298 = vmul.f32 1.0, %v1297
        %v1299 = vrcp.pop %v833
        %v1300 = vmul.f32 %v833, %v1299
        %v1301 = vsub.f32 1.0, %v1300
        %v1302 = vmul.f32 %v1299, %v1301
        %v1303 = vadd.f32 %v1299, %v1302
        %vm1304 = vweird.f32 %v833
        %vm1305 = vweird.f32 %v1299
        %vm1306 = vmor %vm1304, %vm1305
        %v1307 = vsel %vm1306, %v1299, %v1303
        %v1308 = vand.u32 2147483647, %v833
        %vm1309 = vcmp.eq.f32.partialorder %v1308, 8.507059e+37
        %v1310 = vand.u32 %v833, 2147483648
        %v1311 = vor.u32 1.1754944e-38, %v1310
        %v1312 = vsel %vm1309, %v1311, %v1307
        %v1313 = vmul.f32 1.0, %v1312
        %v1314 = vpack.c.bf16 %v863, %v848
        %v1315 = vpack.c.bf16 %v893, %v878
        %v1316 = vpack.c.bf16 %v923, %v908
        %v1317 = vpack.c.bf16 %v953, %v938
        %v1318 = vpack.c.bf16 %v983, %v968
        %v1319 = vpack.c.bf16 %v1013, %v998
        %v1320 = vpack.c.bf16 %v1043, %v1028
        %v1321 = vpack.c.bf16 %v1073, %v1058
        %v1322 = vpack.c.bf16 %v1103, %v1088
        %v1323 = vpack.c.bf16 %v1133, %v1118
        %v1324 = vpack.c.bf16 %v1163, %v1148
        %v1325 = vpack.c.bf16 %v1193, %v1178
        %v1326 = vpack.c.bf16 %v1223, %v1208
        %v1327 = vpack.c.bf16 %v1253, %v1238
        %v1328 = vpack.c.bf16 %v1283, %v1268
        %v1329 = vpack.c.bf16 %v1313, %v1298
        %v1330 = vld [vmem:[#allocation7] sm:$0xf]
        %v1331 = vld [vmem:[#allocation7 + $0x4] sm:$0xf]
        %v1332 = vld [vmem:[#allocation7 + $0x8] sm:$0xf]
        %v1333 = vld [vmem:[#allocation7 + $0xc] sm:$0xf]
        %v1334 = vld [vmem:[#allocation7 + $0x10] sm:$0xf]
        %v1335 = vld [vmem:[#allocation7 + $0x14] sm:$0xf]
        %v1336 = vld [vmem:[#allocation7 + $0x18] sm:$0xf]
        %v1337 = vld [vmem:[#allocation7 + $0x1c] sm:$0xf]
        %v1338 = vld [vmem:[#allocation7 + $0x20] sm:$0xf]
        %v1339 = vld [vmem:[#allocation7 + $0x24] sm:$0xf]
        %v1340 = vld [vmem:[#allocation7 + $0x28] sm:$0xf]
        %v1341 = vld [vmem:[#allocation7 + $0x2c] sm:$0xf]
        %v1342 = vld [vmem:[#allocation7 + $0x30] sm:$0xf]
        %v1343 = vld [vmem:[#allocation7 + $0x34] sm:$0xf]
        %v1344 = vld [vmem:[#allocation7 + $0x38] sm:$0xf]
        %v1345 = vld [vmem:[#allocation7 + $0x3c] sm:$0xf]
        %v1346 = vld [vmem:[%s4] sm:$0x1]
        %v1348 = vperm.slane %v1346, 0
        %v1366 = vunpack.c.l.b16 %v1330
        %v1367 = vunpack.c.l.b16 %v1331
        %v1368 = vunpack.c.l.b16 %v1332
        %v1369 = vunpack.c.l.b16 %v1333
        %v1370 = vunpack.c.l.b16 %v1334
        %v1371 = vunpack.c.l.b16 %v1335
        %v1372 = vunpack.c.l.b16 %v1336
        %v1373 = vunpack.c.l.b16 %v1337
        %v1374 = vunpack.c.l.b16 %v1338
        %v1375 = vunpack.c.l.b16 %v1339
        %v1376 = vunpack.c.l.b16 %v1340
        %v1377 = vunpack.c.l.b16 %v1341
        %v1378 = vunpack.c.l.b16 %v1342
        %v1379 = vunpack.c.l.b16 %v1343
        %v1380 = vunpack.c.l.b16 %v1344
        %v1381 = vunpack.c.l.b16 %v1345
        %v1382 = vpack.c.b16 %v1367, %v1366
        %v1383 = vpack.c.b16 %v1369, %v1368
        %v1384 = vpack.c.b16 %v1371, %v1370
        %v1385 = vpack.c.b16 %v1373, %v1372
        %v1386 = vpack.c.b16 %v1375, %v1374
        %v1387 = vpack.c.b16 %v1377, %v1376
        %v1388 = vpack.c.b16 %v1379, %v1378
        %v1389 = vpack.c.b16 %v1381, %v1380
        %1398 = vmatpush.bf16.msra.mxu0 %v1389
        %1399 = vmatpush.bf16.msra.mxu0 %v1388
        %1400 = vmatpush.bf16.msra.mxu0 %v1387
        %1401 = vmatpush.bf16.msra.mxu0 %v1386
        %1402 = vmatpush.bf16.msra.mxu0 %v1385
        %1403 = vmatpush.bf16.msra.mxu0 %v1384
        %1404 = vmatpush.bf16.msra.mxu0 %v1383
        %1405 = vmatpush.bf16.msra.mxu0 %v1382
        %1406 = vmatmul.bf16.gmra.mxu0 %v1314
        %v1407 = vpop.f32.mrf.mxu0
        %v1408 = vadd.f32 %v1348, %v1407
        %v1409 = vpop.f32.mrf.mxu0
        %v1410 = vadd.f32 %v1348, %v1409
        %1411 = vmatmul.bf16.gmra.mxu0 %v1315
        %v1412 = vpop.f32.mrf.mxu0
        %v1413 = vadd.f32 %v1348, %v1412
        %v1414 = vpop.f32.mrf.mxu0
        %v1415 = vadd.f32 %v1348, %v1414
        %1416 = vmatmul.bf16.gmra.mxu0 %v1316
        %v1417 = vpop.f32.mrf.mxu0
        %v1418 = vadd.f32 %v1348, %v1417
        %v1419 = vpop.f32.mrf.mxu0
        %v1420 = vadd.f32 %v1348, %v1419
        %1421 = vmatmul.bf16.gmra.mxu0 %v1317
        %v1422 = vpop.f32.mrf.mxu0
        %v1423 = vadd.f32 %v1348, %v1422
        %v1424 = vpop.f32.mrf.mxu0
        %v1425 = vadd.f32 %v1348, %v1424
        %1426 = vmatmul.bf16.gmra.mxu0 %v1318
        %v1427 = vpop.f32.mrf.mxu0
        %v1428 = vadd.f32 %v1348, %v1427
        %v1429 = vpop.f32.mrf.mxu0
        %v1430 = vadd.f32 %v1348, %v1429
        %1431 = vmatmul.bf16.gmra.mxu0 %v1319
        %v1432 = vpop.f32.mrf.mxu0
        %v1433 = vadd.f32 %v1348, %v1432
        %v1434 = vpop.f32.mrf.mxu0
        %v1435 = vadd.f32 %v1348, %v1434
        %1436 = vmatmul.bf16.gmra.mxu0 %v1320
        %v1437 = vpop.f32.mrf.mxu0
        %v1438 = vadd.f32 %v1348, %v1437
        %v1439 = vpop.f32.mrf.mxu0
        %v1440 = vadd.f32 %v1348, %v1439
        %1441 = vmatmul.bf16.gmra.mxu0 %v1321
        %v1442 = vpop.f32.mrf.mxu0
        %v1443 = vadd.f32 %v1348, %v1442
        %v1444 = vpop.f32.mrf.mxu0
        %v1445 = vadd.f32 %v1348, %v1444
        %1446 = vmatmul.bf16.gmra.mxu0 %v1322
        %v1447 = vpop.f32.mrf.mxu0
        %v1448 = vadd.f32 %v1348, %v1447
        %v1449 = vpop.f32.mrf.mxu0
        %v1450 = vadd.f32 %v1348, %v1449
        %1451 = vmatmul.bf16.gmra.mxu0 %v1323
        %v1452 = vpop.f32.mrf.mxu0
        %v1453 = vadd.f32 %v1348, %v1452
        %v1454 = vpop.f32.mrf.mxu0
        %v1455 = vadd.f32 %v1348, %v1454
        %1456 = vmatmul.bf16.gmra.mxu0 %v1324
        %v1457 = vpop.f32.mrf.mxu0
        %v1458 = vadd.f32 %v1348, %v1457
        %v1459 = vpop.f32.mrf.mxu0
        %v1460 = vadd.f32 %v1348, %v1459
        %1461 = vmatmul.bf16.gmra.mxu0 %v1325
        %v1462 = vpop.f32.mrf.mxu0
        %v1463 = vadd.f32 %v1348, %v1462
        %v1464 = vpop.f32.mrf.mxu0
        %v1465 = vadd.f32 %v1348, %v1464
        %1466 = vmatmul.bf16.gmra.mxu0 %v1326
        %v1467 = vpop.f32.mrf.mxu0
        %v1468 = vadd.f32 %v1348, %v1467
        %v1469 = vpop.f32.mrf.mxu0
        %v1470 = vadd.f32 %v1348, %v1469
        %1471 = vmatmul.bf16.gmra.mxu0 %v1327
        %v1472 = vpop.f32.mrf.mxu0
        %v1473 = vadd.f32 %v1348, %v1472
        %v1474 = vpop.f32.mrf.mxu0
        %v1475 = vadd.f32 %v1348, %v1474
        %1476 = vmatmul.bf16.gmra.mxu0 %v1328
        %v1477 = vpop.f32.mrf.mxu0
        %v1478 = vadd.f32 %v1348, %v1477
        %v1479 = vpop.f32.mrf.mxu0
        %v1480 = vadd.f32 %v1348, %v1479
        %1481 = vmatmul.bf16.gmra.mxu0 %v1329
        %v1482 = vpop.f32.mrf.mxu0
        %v1483 = vadd.f32 %v1348, %v1482
        %v1484 = vpop.f32.mrf.mxu0
        %v1485 = vadd.f32 %v1348, %v1484
        %1486 = vdwg.mxu0
        %v1487 = vxor.u32 %v1408, 2147483648
        %v1488 = vxor.u32 %v1410, 2147483648
        %v1489 = vxor.u32 %v1413, 2147483648
        %v1490 = vxor.u32 %v1415, 2147483648
        %v1491 = vxor.u32 %v1418, 2147483648
        %v1492 = vxor.u32 %v1420, 2147483648
        %v1493 = vxor.u32 %v1423, 2147483648
        %v1494 = vxor.u32 %v1425, 2147483648
        %v1495 = vxor.u32 %v1428, 2147483648
        %v1496 = vxor.u32 %v1430, 2147483648
        %v1497 = vxor.u32 %v1433, 2147483648
        %v1498 = vxor.u32 %v1435, 2147483648
        %v1499 = vxor.u32 %v1438, 2147483648
        %v1500 = vxor.u32 %v1440, 2147483648
        %v1501 = vxor.u32 %v1443, 2147483648
        %v1502 = vxor.u32 %v1445, 2147483648
        %v1503 = vxor.u32 %v1448, 2147483648
        %v1504 = vxor.u32 %v1450, 2147483648
        %v1505 = vxor.u32 %v1453, 2147483648
        %v1506 = vxor.u32 %v1455, 2147483648
        %v1507 = vxor.u32 %v1458, 2147483648
        %v1508 = vxor.u32 %v1460, 2147483648
        %v1509 = vxor.u32 %v1463, 2147483648
        %v1510 = vxor.u32 %v1465, 2147483648
        %v1511 = vxor.u32 %v1468, 2147483648
        %v1512 = vxor.u32 %v1470, 2147483648
        %v1513 = vxor.u32 %v1473, 2147483648
        %v1514 = vxor.u32 %v1475, 2147483648
        %v1515 = vxor.u32 %v1478, 2147483648
        %v1516 = vxor.u32 %v1480, 2147483648
        %v1517 = vxor.u32 %v1483, 2147483648
        %v1518 = vxor.u32 %v1485, 2147483648
        %v1519 = vmul.f32 %v1487, 1.442695
        %v1520 = vpow.pop %v1519
        %v1521 = vmul.f32 %v1488, 1.442695
        %v1522 = vpow.pop %v1521
        %v1523 = vmul.f32 %v1489, 1.442695
        %v1524 = vpow.pop %v1523
        %v1525 = vmul.f32 %v1490, 1.442695
        %v1526 = vpow.pop %v1525
        %v1527 = vmul.f32 %v1491, 1.442695
        %v1528 = vpow.pop %v1527
        %v1529 = vmul.f32 %v1492, 1.442695
        %v1530 = vpow.pop %v1529
        %v1531 = vmul.f32 %v1493, 1.442695
        %v1532 = vpow.pop %v1531
        %v1533 = vmul.f32 %v1494, 1.442695
        %v1534 = vpow.pop %v1533
        %v1535 = vmul.f32 %v1495, 1.442695
        %v1536 = vpow.pop %v1535
        %v1537 = vmul.f32 %v1496, 1.442695
        %v1538 = vpow.pop %v1537
        %v1539 = vmul.f32 %v1497, 1.442695
        %v1540 = vpow.pop %v1539
        %v1541 = vmul.f32 %v1498, 1.442695
        %v1542 = vpow.pop %v1541
        %v1543 = vmul.f32 %v1499, 1.442695
        %v1544 = vpow.pop %v1543
        %v1545 = vmul.f32 %v1500, 1.442695
        %v1546 = vpow.pop %v1545
        %v1547 = vmul.f32 %v1501, 1.442695
        %v1548 = vpow.pop %v1547
        %v1549 = vmul.f32 %v1502, 1.442695
        %v1550 = vpow.pop %v1549
        %v1551 = vmul.f32 %v1503, 1.442695
        %v1552 = vpow.pop %v1551
        %v1553 = vmul.f32 %v1504, 1.442695
        %v1554 = vpow.pop %v1553
        %v1555 = vmul.f32 %v1505, 1.442695
        %v1556 = vpow.pop %v1555
        %v1557 = vmul.f32 %v1506, 1.442695
        %v1558 = vpow.pop %v1557
        %v1559 = vmul.f32 %v1507, 1.442695
        %v1560 = vpow.pop %v1559
        %v1561 = vmul.f32 %v1508, 1.442695
        %v1562 = vpow.pop %v1561
        %v1563 = vmul.f32 %v1509, 1.442695
        %v1564 = vpow.pop %v1563
        %v1565 = vmul.f32 %v1510, 1.442695
        %v1566 = vpow.pop %v1565
        %v1567 = vmul.f32 %v1511, 1.442695
        %v1568 = vpow.pop %v1567
        %v1569 = vmul.f32 %v1512, 1.442695
        %v1570 = vpow.pop %v1569
        %v1571 = vmul.f32 %v1513, 1.442695
        %v1572 = vpow.pop %v1571
        %v1573 = vmul.f32 %v1514, 1.442695
        %v1574 = vpow.pop %v1573
        %v1575 = vmul.f32 %v1515, 1.442695
        %v1576 = vpow.pop %v1575
        %v1577 = vmul.f32 %v1516, 1.442695
        %v1578 = vpow.pop %v1577
        %v1579 = vmul.f32 %v1517, 1.442695
        %v1580 = vpow.pop %v1579
        %v1581 = vmul.f32 %v1518, 1.442695
        %v1582 = vpow.pop %v1581
        %v1583 = vadd.f32 %v1520, 1.0
        %v1584 = vadd.f32 %v1522, 1.0
        %v1585 = vadd.f32 %v1524, 1.0
        %v1586 = vadd.f32 %v1526, 1.0
        %v1587 = vadd.f32 %v1528, 1.0
        %v1588 = vadd.f32 %v1530, 1.0
        %v1589 = vadd.f32 %v1532, 1.0
        %v1590 = vadd.f32 %v1534, 1.0
        %v1591 = vadd.f32 %v1536, 1.0
        %v1592 = vadd.f32 %v1538, 1.0
        %v1593 = vadd.f32 %v1540, 1.0
        %v1594 = vadd.f32 %v1542, 1.0
        %v1595 = vadd.f32 %v1544, 1.0
        %v1596 = vadd.f32 %v1546, 1.0
        %v1597 = vadd.f32 %v1548, 1.0
        %v1598 = vadd.f32 %v1550, 1.0
        %v1599 = vadd.f32 %v1552, 1.0
        %v1600 = vadd.f32 %v1554, 1.0
        %v1601 = vadd.f32 %v1556, 1.0
        %v1602 = vadd.f32 %v1558, 1.0
        %v1603 = vadd.f32 %v1560, 1.0
        %v1604 = vadd.f32 %v1562, 1.0
        %v1605 = vadd.f32 %v1564, 1.0
        %v1606 = vadd.f32 %v1566, 1.0
        %v1607 = vadd.f32 %v1568, 1.0
        %v1608 = vadd.f32 %v1570, 1.0
        %v1609 = vadd.f32 %v1572, 1.0
        %v1610 = vadd.f32 %v1574, 1.0
        %v1611 = vadd.f32 %v1576, 1.0
        %v1612 = vadd.f32 %v1578, 1.0
        %v1613 = vadd.f32 %v1580, 1.0
        %v1614 = vadd.f32 %v1582, 1.0
        %v1615 = vrcp.pop %v1583
        %v1616 = vmul.f32 %v1583, %v1615
        %v1617 = vsub.f32 1.0, %v1616
        %v1618 = vmul.f32 %v1615, %v1617
        %v1619 = vadd.f32 %v1615, %v1618
        %vm1620 = vweird.f32 %v1583
        %vm1621 = vweird.f32 %v1615
        %vm1622 = vmor %vm1620, %vm1621
        %v1623 = vsel %vm1622, %v1615, %v1619
        %v1624 = vand.u32 2147483647, %v1583
        %vm1625 = vcmp.eq.f32.partialorder %v1624, 8.507059e+37
        %v1626 = vand.u32 %v1583, 2147483648
        %v1627 = vor.u32 1.1754944e-38, %v1626
        %v1628 = vsel %vm1625, %v1627, %v1623
        %v1629 = vmul.f32 1.0, %v1628
        %v1630 = vrcp.pop %v1584
        %v1631 = vmul.f32 %v1584, %v1630
        %v1632 = vsub.f32 1.0, %v1631
        %v1633 = vmul.f32 %v1630, %v1632
        %v1634 = vadd.f32 %v1630, %v1633
        %vm1635 = vweird.f32 %v1584
        %vm1636 = vweird.f32 %v1630
        %vm1637 = vmor %vm1635, %vm1636
        %v1638 = vsel %vm1637, %v1630, %v1634
        %v1639 = vand.u32 2147483647, %v1584
        %vm1640 = vcmp.eq.f32.partialorder %v1639, 8.507059e+37
        %v1641 = vand.u32 %v1584, 2147483648
        %v1642 = vor.u32 1.1754944e-38, %v1641
        %v1643 = vsel %vm1640, %v1642, %v1638
        %v1644 = vmul.f32 1.0, %v1643
        %v1645 = vrcp.pop %v1585
        %v1646 = vmul.f32 %v1585, %v1645
        %v1647 = vsub.f32 1.0, %v1646
        %v1648 = vmul.f32 %v1645, %v1647
        %v1649 = vadd.f32 %v1645, %v1648
        %vm1650 = vweird.f32 %v1585
        %vm1651 = vweird.f32 %v1645
        %vm1652 = vmor %vm1650, %vm1651
        %v1653 = vsel %vm1652, %v1645, %v1649
        %v1654 = vand.u32 2147483647, %v1585
        %vm1655 = vcmp.eq.f32.partialorder %v1654, 8.507059e+37
        %v1656 = vand.u32 %v1585, 2147483648
        %v1657 = vor.u32 1.1754944e-38, %v1656
        %v1658 = vsel %vm1655, %v1657, %v1653
        %v1659 = vmul.f32 1.0, %v1658
        %v1660 = vrcp.pop %v1586
        %v1661 = vmul.f32 %v1586, %v1660
        %v1662 = vsub.f32 1.0, %v1661
        %v1663 = vmul.f32 %v1660, %v1662
        %v1664 = vadd.f32 %v1660, %v1663
        %vm1665 = vweird.f32 %v1586
        %vm1666 = vweird.f32 %v1660
        %vm1667 = vmor %vm1665, %vm1666
        %v1668 = vsel %vm1667, %v1660, %v1664
        %v1669 = vand.u32 2147483647, %v1586
        %vm1670 = vcmp.eq.f32.partialorder %v1669, 8.507059e+37
        %v1671 = vand.u32 %v1586, 2147483648
        %v1672 = vor.u32 1.1754944e-38, %v1671
        %v1673 = vsel %vm1670, %v1672, %v1668
        %v1674 = vmul.f32 1.0, %v1673
        %v1675 = vrcp.pop %v1587
        %v1676 = vmul.f32 %v1587, %v1675
        %v1677 = vsub.f32 1.0, %v1676
        %v1678 = vmul.f32 %v1675, %v1677
        %v1679 = vadd.f32 %v1675, %v1678
        %vm1680 = vweird.f32 %v1587
        %vm1681 = vweird.f32 %v1675
        %vm1682 = vmor %vm1680, %vm1681
        %v1683 = vsel %vm1682, %v1675, %v1679
        %v1684 = vand.u32 2147483647, %v1587
        %vm1685 = vcmp.eq.f32.partialorder %v1684, 8.507059e+37
        %v1686 = vand.u32 %v1587, 2147483648
        %v1687 = vor.u32 1.1754944e-38, %v1686
        %v1688 = vsel %vm1685, %v1687, %v1683
        %v1689 = vmul.f32 1.0, %v1688
        %v1690 = vrcp.pop %v1588
        %v1691 = vmul.f32 %v1588, %v1690
        %v1692 = vsub.f32 1.0, %v1691
        %v1693 = vmul.f32 %v1690, %v1692
        %v1694 = vadd.f32 %v1690, %v1693
        %vm1695 = vweird.f32 %v1588
        %vm1696 = vweird.f32 %v1690
        %vm1697 = vmor %vm1695, %vm1696
        %v1698 = vsel %vm1697, %v1690, %v1694
        %v1699 = vand.u32 2147483647, %v1588
        %vm1700 = vcmp.eq.f32.partialorder %v1699, 8.507059e+37
        %v1701 = vand.u32 %v1588, 2147483648
        %v1702 = vor.u32 1.1754944e-38, %v1701
        %v1703 = vsel %vm1700, %v1702, %v1698
        %v1704 = vmul.f32 1.0, %v1703
        %v1705 = vrcp.pop %v1589
        %v1706 = vmul.f32 %v1589, %v1705
        %v1707 = vsub.f32 1.0, %v1706
        %v1708 = vmul.f32 %v1705, %v1707
        %v1709 = vadd.f32 %v1705, %v1708
        %vm1710 = vweird.f32 %v1589
        %vm1711 = vweird.f32 %v1705
        %vm1712 = vmor %vm1710, %vm1711
        %v1713 = vsel %vm1712, %v1705, %v1709
        %v1714 = vand.u32 2147483647, %v1589
        %vm1715 = vcmp.eq.f32.partialorder %v1714, 8.507059e+37
        %v1716 = vand.u32 %v1589, 2147483648
        %v1717 = vor.u32 1.1754944e-38, %v1716
        %v1718 = vsel %vm1715, %v1717, %v1713
        %v1719 = vmul.f32 1.0, %v1718
        %v1720 = vrcp.pop %v1590
        %v1721 = vmul.f32 %v1590, %v1720
        %v1722 = vsub.f32 1.0, %v1721
        %v1723 = vmul.f32 %v1720, %v1722
        %v1724 = vadd.f32 %v1720, %v1723
        %vm1725 = vweird.f32 %v1590
        %vm1726 = vweird.f32 %v1720
        %vm1727 = vmor %vm1725, %vm1726
        %v1728 = vsel %vm1727, %v1720, %v1724
        %v1729 = vand.u32 2147483647, %v1590
        %vm1730 = vcmp.eq.f32.partialorder %v1729, 8.507059e+37
        %v1731 = vand.u32 %v1590, 2147483648
        %v1732 = vor.u32 1.1754944e-38, %v1731
        %v1733 = vsel %vm1730, %v1732, %v1728
        %v1734 = vmul.f32 1.0, %v1733
        %v1735 = vrcp.pop %v1591
        %v1736 = vmul.f32 %v1591, %v1735
        %v1737 = vsub.f32 1.0, %v1736
        %v1738 = vmul.f32 %v1735, %v1737
        %v1739 = vadd.f32 %v1735, %v1738
        %vm1740 = vweird.f32 %v1591
        %vm1741 = vweird.f32 %v1735
        %vm1742 = vmor %vm1740, %vm1741
        %v1743 = vsel %vm1742, %v1735, %v1739
        %v1744 = vand.u32 2147483647, %v1591
        %vm1745 = vcmp.eq.f32.partialorder %v1744, 8.507059e+37
        %v1746 = vand.u32 %v1591, 2147483648
        %v1747 = vor.u32 1.1754944e-38, %v1746
        %v1748 = vsel %vm1745, %v1747, %v1743
        %v1749 = vmul.f32 1.0, %v1748
        %v1750 = vrcp.pop %v1592
        %v1751 = vmul.f32 %v1592, %v1750
        %v1752 = vsub.f32 1.0, %v1751
        %v1753 = vmul.f32 %v1750, %v1752
        %v1754 = vadd.f32 %v1750, %v1753
        %vm1755 = vweird.f32 %v1592
        %vm1756 = vweird.f32 %v1750
        %vm1757 = vmor %vm1755, %vm1756
        %v1758 = vsel %vm1757, %v1750, %v1754
        %v1759 = vand.u32 2147483647, %v1592
        %vm1760 = vcmp.eq.f32.partialorder %v1759, 8.507059e+37
        %v1761 = vand.u32 %v1592, 2147483648
        %v1762 = vor.u32 1.1754944e-38, %v1761
        %v1763 = vsel %vm1760, %v1762, %v1758
        %v1764 = vmul.f32 1.0, %v1763
        %v1765 = vrcp.pop %v1593
        %v1766 = vmul.f32 %v1593, %v1765
        %v1767 = vsub.f32 1.0, %v1766
        %v1768 = vmul.f32 %v1765, %v1767
        %v1769 = vadd.f32 %v1765, %v1768
        %vm1770 = vweird.f32 %v1593
        %vm1771 = vweird.f32 %v1765
        %vm1772 = vmor %vm1770, %vm1771
        %v1773 = vsel %vm1772, %v1765, %v1769
        %v1774 = vand.u32 2147483647, %v1593
        %vm1775 = vcmp.eq.f32.partialorder %v1774, 8.507059e+37
        %v1776 = vand.u32 %v1593, 2147483648
        %v1777 = vor.u32 1.1754944e-38, %v1776
        %v1778 = vsel %vm1775, %v1777, %v1773
        %v1779 = vmul.f32 1.0, %v1778
        %v1780 = vrcp.pop %v1594
        %v1781 = vmul.f32 %v1594, %v1780
        %v1782 = vsub.f32 1.0, %v1781
        %v1783 = vmul.f32 %v1780, %v1782
        %v1784 = vadd.f32 %v1780, %v1783
        %vm1785 = vweird.f32 %v1594
        %vm1786 = vweird.f32 %v1780
        %vm1787 = vmor %vm1785, %vm1786
        %v1788 = vsel %vm1787, %v1780, %v1784
        %v1789 = vand.u32 2147483647, %v1594
        %vm1790 = vcmp.eq.f32.partialorder %v1789, 8.507059e+37
        %v1791 = vand.u32 %v1594, 2147483648
        %v1792 = vor.u32 1.1754944e-38, %v1791
        %v1793 = vsel %vm1790, %v1792, %v1788
        %v1794 = vmul.f32 1.0, %v1793
        %v1795 = vrcp.pop %v1595
        %v1796 = vmul.f32 %v1595, %v1795
        %v1797 = vsub.f32 1.0, %v1796
        %v1798 = vmul.f32 %v1795, %v1797
        %v1799 = vadd.f32 %v1795, %v1798
        %vm1800 = vweird.f32 %v1595
        %vm1801 = vweird.f32 %v1795
        %vm1802 = vmor %vm1800, %vm1801
        %v1803 = vsel %vm1802, %v1795, %v1799
        %v1804 = vand.u32 2147483647, %v1595
        %vm1805 = vcmp.eq.f32.partialorder %v1804, 8.507059e+37
        %v1806 = vand.u32 %v1595, 2147483648
        %v1807 = vor.u32 1.1754944e-38, %v1806
        %v1808 = vsel %vm1805, %v1807, %v1803
        %v1809 = vmul.f32 1.0, %v1808
        %v1810 = vrcp.pop %v1596
        %v1811 = vmul.f32 %v1596, %v1810
        %v1812 = vsub.f32 1.0, %v1811
        %v1813 = vmul.f32 %v1810, %v1812
        %v1814 = vadd.f32 %v1810, %v1813
        %vm1815 = vweird.f32 %v1596
        %vm1816 = vweird.f32 %v1810
        %vm1817 = vmor %vm1815, %vm1816
        %v1818 = vsel %vm1817, %v1810, %v1814
        %v1819 = vand.u32 2147483647, %v1596
        %vm1820 = vcmp.eq.f32.partialorder %v1819, 8.507059e+37
        %v1821 = vand.u32 %v1596, 2147483648
        %v1822 = vor.u32 1.1754944e-38, %v1821
        %v1823 = vsel %vm1820, %v1822, %v1818
        %v1824 = vmul.f32 1.0, %v1823
        %v1825 = vrcp.pop %v1597
        %v1826 = vmul.f32 %v1597, %v1825
        %v1827 = vsub.f32 1.0, %v1826
        %v1828 = vmul.f32 %v1825, %v1827
        %v1829 = vadd.f32 %v1825, %v1828
        %vm1830 = vweird.f32 %v1597
        %vm1831 = vweird.f32 %v1825
        %vm1832 = vmor %vm1830, %vm1831
        %v1833 = vsel %vm1832, %v1825, %v1829
        %v1834 = vand.u32 2147483647, %v1597
        %vm1835 = vcmp.eq.f32.partialorder %v1834, 8.507059e+37
        %v1836 = vand.u32 %v1597, 2147483648
        %v1837 = vor.u32 1.1754944e-38, %v1836
        %v1838 = vsel %vm1835, %v1837, %v1833
        %v1839 = vmul.f32 1.0, %v1838
        %v1840 = vrcp.pop %v1598
        %v1841 = vmul.f32 %v1598, %v1840
        %v1842 = vsub.f32 1.0, %v1841
        %v1843 = vmul.f32 %v1840, %v1842
        %v1844 = vadd.f32 %v1840, %v1843
        %vm1845 = vweird.f32 %v1598
        %vm1846 = vweird.f32 %v1840
        %vm1847 = vmor %vm1845, %vm1846
        %v1848 = vsel %vm1847, %v1840, %v1844
        %v1849 = vand.u32 2147483647, %v1598
        %vm1850 = vcmp.eq.f32.partialorder %v1849, 8.507059e+37
        %v1851 = vand.u32 %v1598, 2147483648
        %v1852 = vor.u32 1.1754944e-38, %v1851
        %v1853 = vsel %vm1850, %v1852, %v1848
        %v1854 = vmul.f32 1.0, %v1853
        %v1855 = vrcp.pop %v1599
        %v1856 = vmul.f32 %v1599, %v1855
        %v1857 = vsub.f32 1.0, %v1856
        %v1858 = vmul.f32 %v1855, %v1857
        %v1859 = vadd.f32 %v1855, %v1858
        %vm1860 = vweird.f32 %v1599
        %vm1861 = vweird.f32 %v1855
        %vm1862 = vmor %vm1860, %vm1861
        %v1863 = vsel %vm1862, %v1855, %v1859
        %v1864 = vand.u32 2147483647, %v1599
        %vm1865 = vcmp.eq.f32.partialorder %v1864, 8.507059e+37
        %v1866 = vand.u32 %v1599, 2147483648
        %v1867 = vor.u32 1.1754944e-38, %v1866
        %v1868 = vsel %vm1865, %v1867, %v1863
        %v1869 = vmul.f32 1.0, %v1868
        %v1870 = vrcp.pop %v1600
        %v1871 = vmul.f32 %v1600, %v1870
        %v1872 = vsub.f32 1.0, %v1871
        %v1873 = vmul.f32 %v1870, %v1872
        %v1874 = vadd.f32 %v1870, %v1873
        %vm1875 = vweird.f32 %v1600
        %vm1876 = vweird.f32 %v1870
        %vm1877 = vmor %vm1875, %vm1876
        %v1878 = vsel %vm1877, %v1870, %v1874
        %v1879 = vand.u32 2147483647, %v1600
        %vm1880 = vcmp.eq.f32.partialorder %v1879, 8.507059e+37
        %v1881 = vand.u32 %v1600, 2147483648
        %v1882 = vor.u32 1.1754944e-38, %v1881
        %v1883 = vsel %vm1880, %v1882, %v1878
        %v1884 = vmul.f32 1.0, %v1883
        %v1885 = vrcp.pop %v1601
        %v1886 = vmul.f32 %v1601, %v1885
        %v1887 = vsub.f32 1.0, %v1886
        %v1888 = vmul.f32 %v1885, %v1887
        %v1889 = vadd.f32 %v1885, %v1888
        %vm1890 = vweird.f32 %v1601
        %vm1891 = vweird.f32 %v1885
        %vm1892 = vmor %vm1890, %vm1891
        %v1893 = vsel %vm1892, %v1885, %v1889
        %v1894 = vand.u32 2147483647, %v1601
        %vm1895 = vcmp.eq.f32.partialorder %v1894, 8.507059e+37
        %v1896 = vand.u32 %v1601, 2147483648
        %v1897 = vor.u32 1.1754944e-38, %v1896
        %v1898 = vsel %vm1895, %v1897, %v1893
        %v1899 = vmul.f32 1.0, %v1898
        %v1900 = vrcp.pop %v1602
        %v1901 = vmul.f32 %v1602, %v1900
        %v1902 = vsub.f32 1.0, %v1901
        %v1903 = vmul.f32 %v1900, %v1902
        %v1904 = vadd.f32 %v1900, %v1903
        %vm1905 = vweird.f32 %v1602
        %vm1906 = vweird.f32 %v1900
        %vm1907 = vmor %vm1905, %vm1906
        %v1908 = vsel %vm1907, %v1900, %v1904
        %v1909 = vand.u32 2147483647, %v1602
        %vm1910 = vcmp.eq.f32.partialorder %v1909, 8.507059e+37
        %v1911 = vand.u32 %v1602, 2147483648
        %v1912 = vor.u32 1.1754944e-38, %v1911
        %v1913 = vsel %vm1910, %v1912, %v1908
        %v1914 = vmul.f32 1.0, %v1913
        %v1915 = vrcp.pop %v1603
        %v1916 = vmul.f32 %v1603, %v1915
        %v1917 = vsub.f32 1.0, %v1916
        %v1918 = vmul.f32 %v1915, %v1917
        %v1919 = vadd.f32 %v1915, %v1918
        %vm1920 = vweird.f32 %v1603
        %vm1921 = vweird.f32 %v1915
        %vm1922 = vmor %vm1920, %vm1921
        %v1923 = vsel %vm1922, %v1915, %v1919
        %v1924 = vand.u32 2147483647, %v1603
        %vm1925 = vcmp.eq.f32.partialorder %v1924, 8.507059e+37
        %v1926 = vand.u32 %v1603, 2147483648
        %v1927 = vor.u32 1.1754944e-38, %v1926
        %v1928 = vsel %vm1925, %v1927, %v1923
        %v1929 = vmul.f32 1.0, %v1928
        %v1930 = vrcp.pop %v1604
        %v1931 = vmul.f32 %v1604, %v1930
        %v1932 = vsub.f32 1.0, %v1931
        %v1933 = vmul.f32 %v1930, %v1932
        %v1934 = vadd.f32 %v1930, %v1933
        %vm1935 = vweird.f32 %v1604
        %vm1936 = vweird.f32 %v1930
        %vm1937 = vmor %vm1935, %vm1936
        %v1938 = vsel %vm1937, %v1930, %v1934
        %v1939 = vand.u32 2147483647, %v1604
        %vm1940 = vcmp.eq.f32.partialorder %v1939, 8.507059e+37
        %v1941 = vand.u32 %v1604, 2147483648
        %v1942 = vor.u32 1.1754944e-38, %v1941
        %v1943 = vsel %vm1940, %v1942, %v1938
        %v1944 = vmul.f32 1.0, %v1943
        %v1945 = vrcp.pop %v1605
        %v1946 = vmul.f32 %v1605, %v1945
        %v1947 = vsub.f32 1.0, %v1946
        %v1948 = vmul.f32 %v1945, %v1947
        %v1949 = vadd.f32 %v1945, %v1948
        %vm1950 = vweird.f32 %v1605
        %vm1951 = vweird.f32 %v1945
        %vm1952 = vmor %vm1950, %vm1951
        %v1953 = vsel %vm1952, %v1945, %v1949
        %v1954 = vand.u32 2147483647, %v1605
        %vm1955 = vcmp.eq.f32.partialorder %v1954, 8.507059e+37
        %v1956 = vand.u32 %v1605, 2147483648
        %v1957 = vor.u32 1.1754944e-38, %v1956
        %v1958 = vsel %vm1955, %v1957, %v1953
        %v1959 = vmul.f32 1.0, %v1958
        %v1960 = vrcp.pop %v1606
        %v1961 = vmul.f32 %v1606, %v1960
        %v1962 = vsub.f32 1.0, %v1961
        %v1963 = vmul.f32 %v1960, %v1962
        %v1964 = vadd.f32 %v1960, %v1963
        %vm1965 = vweird.f32 %v1606
        %vm1966 = vweird.f32 %v1960
        %vm1967 = vmor %vm1965, %vm1966
        %v1968 = vsel %vm1967, %v1960, %v1964
        %v1969 = vand.u32 2147483647, %v1606
        %vm1970 = vcmp.eq.f32.partialorder %v1969, 8.507059e+37
        %v1971 = vand.u32 %v1606, 2147483648
        %v1972 = vor.u32 1.1754944e-38, %v1971
        %v1973 = vsel %vm1970, %v1972, %v1968
        %v1974 = vmul.f32 1.0, %v1973
        %v1975 = vrcp.pop %v1607
        %v1976 = vmul.f32 %v1607, %v1975
        %v1977 = vsub.f32 1.0, %v1976
        %v1978 = vmul.f32 %v1975, %v1977
        %v1979 = vadd.f32 %v1975, %v1978
        %vm1980 = vweird.f32 %v1607
        %vm1981 = vweird.f32 %v1975
        %vm1982 = vmor %vm1980, %vm1981
        %v1983 = vsel %vm1982, %v1975, %v1979
        %v1984 = vand.u32 2147483647, %v1607
        %vm1985 = vcmp.eq.f32.partialorder %v1984, 8.507059e+37
        %v1986 = vand.u32 %v1607, 2147483648
        %v1987 = vor.u32 1.1754944e-38, %v1986
        %v1988 = vsel %vm1985, %v1987, %v1983
        %v1989 = vmul.f32 1.0, %v1988
        %v1990 = vrcp.pop %v1608
        %v1991 = vmul.f32 %v1608, %v1990
        %v1992 = vsub.f32 1.0, %v1991
        %v1993 = vmul.f32 %v1990, %v1992
        %v1994 = vadd.f32 %v1990, %v1993
        %vm1995 = vweird.f32 %v1608
        %vm1996 = vweird.f32 %v1990
        %vm1997 = vmor %vm1995, %vm1996
        %v1998 = vsel %vm1997, %v1990, %v1994
        %v1999 = vand.u32 2147483647, %v1608
        %vm2000 = vcmp.eq.f32.partialorder %v1999, 8.507059e+37
        %v2001 = vand.u32 %v1608, 2147483648
        %v2002 = vor.u32 1.1754944e-38, %v2001
        %v2003 = vsel %vm2000, %v2002, %v1998
        %v2004 = vmul.f32 1.0, %v2003
        %v2005 = vrcp.pop %v1609
        %v2006 = vmul.f32 %v1609, %v2005
        %v2007 = vsub.f32 1.0, %v2006
        %v2008 = vmul.f32 %v2005, %v2007
        %v2009 = vadd.f32 %v2005, %v2008
        %vm2010 = vweird.f32 %v1609
        %vm2011 = vweird.f32 %v2005
        %vm2012 = vmor %vm2010, %vm2011
        %v2013 = vsel %vm2012, %v2005, %v2009
        %v2014 = vand.u32 2147483647, %v1609
        %vm2015 = vcmp.eq.f32.partialorder %v2014, 8.507059e+37
        %v2016 = vand.u32 %v1609, 2147483648
        %v2017 = vor.u32 1.1754944e-38, %v2016
        %v2018 = vsel %vm2015, %v2017, %v2013
        %v2019 = vmul.f32 1.0, %v2018
        %v2020 = vrcp.pop %v1610
        %v2021 = vmul.f32 %v1610, %v2020
        %v2022 = vsub.f32 1.0, %v2021
        %v2023 = vmul.f32 %v2020, %v2022
        %v2024 = vadd.f32 %v2020, %v2023
        %vm2025 = vweird.f32 %v1610
        %vm2026 = vweird.f32 %v2020
        %vm2027 = vmor %vm2025, %vm2026
        %v2028 = vsel %vm2027, %v2020, %v2024
        %v2029 = vand.u32 2147483647, %v1610
        %vm2030 = vcmp.eq.f32.partialorder %v2029, 8.507059e+37
        %v2031 = vand.u32 %v1610, 2147483648
        %v2032 = vor.u32 1.1754944e-38, %v2031
        %v2033 = vsel %vm2030, %v2032, %v2028
        %v2034 = vmul.f32 1.0, %v2033
        %v2035 = vrcp.pop %v1611
        %v2036 = vmul.f32 %v1611, %v2035
        %v2037 = vsub.f32 1.0, %v2036
        %v2038 = vmul.f32 %v2035, %v2037
        %v2039 = vadd.f32 %v2035, %v2038
        %vm2040 = vweird.f32 %v1611
        %vm2041 = vweird.f32 %v2035
        %vm2042 = vmor %vm2040, %vm2041
        %v2043 = vsel %vm2042, %v2035, %v2039
        %v2044 = vand.u32 2147483647, %v1611
        %vm2045 = vcmp.eq.f32.partialorder %v2044, 8.507059e+37
        %v2046 = vand.u32 %v1611, 2147483648
        %v2047 = vor.u32 1.1754944e-38, %v2046
        %v2048 = vsel %vm2045, %v2047, %v2043
        %v2049 = vmul.f32 1.0, %v2048
        %v2050 = vrcp.pop %v1612
        %v2051 = vmul.f32 %v1612, %v2050
        %v2052 = vsub.f32 1.0, %v2051
        %v2053 = vmul.f32 %v2050, %v2052
        %v2054 = vadd.f32 %v2050, %v2053
        %vm2055 = vweird.f32 %v1612
        %vm2056 = vweird.f32 %v2050
        %vm2057 = vmor %vm2055, %vm2056
        %v2058 = vsel %vm2057, %v2050, %v2054
        %v2059 = vand.u32 2147483647, %v1612
        %vm2060 = vcmp.eq.f32.partialorder %v2059, 8.507059e+37
        %v2061 = vand.u32 %v1612, 2147483648
        %v2062 = vor.u32 1.1754944e-38, %v2061
        %v2063 = vsel %vm2060, %v2062, %v2058
        %v2064 = vmul.f32 1.0, %v2063
        %v2065 = vrcp.pop %v1613
        %v2066 = vmul.f32 %v1613, %v2065
        %v2067 = vsub.f32 1.0, %v2066
        %v2068 = vmul.f32 %v2065, %v2067
        %v2069 = vadd.f32 %v2065, %v2068
        %vm2070 = vweird.f32 %v1613
        %vm2071 = vweird.f32 %v2065
        %vm2072 = vmor %vm2070, %vm2071
        %v2073 = vsel %vm2072, %v2065, %v2069
        %v2074 = vand.u32 2147483647, %v1613
        %vm2075 = vcmp.eq.f32.partialorder %v2074, 8.507059e+37
        %v2076 = vand.u32 %v1613, 2147483648
        %v2077 = vor.u32 1.1754944e-38, %v2076
        %v2078 = vsel %vm2075, %v2077, %v2073
        %v2079 = vmul.f32 1.0, %v2078
        %v2080 = vrcp.pop %v1614
        %v2081 = vmul.f32 %v1614, %v2080
        %v2082 = vsub.f32 1.0, %v2081
        %v2083 = vmul.f32 %v2080, %v2082
        %v2084 = vadd.f32 %v2080, %v2083
        %vm2085 = vweird.f32 %v1614
        %vm2086 = vweird.f32 %v2080
        %vm2087 = vmor %vm2085, %vm2086
        %v2088 = vsel %vm2087, %v2080, %v2084
        %v2089 = vand.u32 2147483647, %v1614
        %vm2090 = vcmp.eq.f32.partialorder %v2089, 8.507059e+37
        %v2091 = vand.u32 %v1614, 2147483648
        %v2092 = vor.u32 1.1754944e-38, %v2091
        %v2093 = vsel %vm2090, %v2092, %v2088
        %v2094 = vmul.f32 1.0, %v2093
        %v2095 = vpack.c.bf16 %v1644, %v1629
        %v2096 = vpack.c.bf16 %v1674, %v1659
        %v2097 = vpack.c.bf16 %v1704, %v1689
        %v2098 = vpack.c.bf16 %v1734, %v1719
        %v2099 = vpack.c.bf16 %v1764, %v1749
        %v2100 = vpack.c.bf16 %v1794, %v1779
        %v2101 = vpack.c.bf16 %v1824, %v1809
        %v2102 = vpack.c.bf16 %v1854, %v1839
        %v2103 = vpack.c.bf16 %v1884, %v1869
        %v2104 = vpack.c.bf16 %v1914, %v1899
        %v2105 = vpack.c.bf16 %v1944, %v1929
        %v2106 = vpack.c.bf16 %v1974, %v1959
        %v2107 = vpack.c.bf16 %v2004, %v1989
        %v2108 = vpack.c.bf16 %v2034, %v2019
        %v2109 = vpack.c.bf16 %v2064, %v2049
        %v2110 = vpack.c.bf16 %v2094, %v2079
        %v2111 = vld [vmem:[#allocation8] sm:$0xf]
        %v2112 = vld [vmem:[#allocation8 + $0x4] sm:$0xf]
        %v2113 = vld [vmem:[#allocation8 + $0x8] sm:$0xf]
        %v2114 = vld [vmem:[#allocation8 + $0xc] sm:$0xf]
        %v2115 = vld [vmem:[#allocation8 + $0x10] sm:$0xf]
        %v2116 = vld [vmem:[#allocation8 + $0x14] sm:$0xf]
        %v2117 = vld [vmem:[#allocation8 + $0x18] sm:$0xf]
        %v2118 = vld [vmem:[#allocation8 + $0x1c] sm:$0xf]
        %v2119 = vld [vmem:[#allocation8 + $0x20] sm:$0xf]
        %v2120 = vld [vmem:[#allocation8 + $0x24] sm:$0xf]
        %v2121 = vld [vmem:[#allocation8 + $0x28] sm:$0xf]
        %v2122 = vld [vmem:[#allocation8 + $0x2c] sm:$0xf]
        %v2123 = vld [vmem:[#allocation8 + $0x30] sm:$0xf]
        %v2124 = vld [vmem:[#allocation8 + $0x34] sm:$0xf]
        %v2125 = vld [vmem:[#allocation8 + $0x38] sm:$0xf]
        %v2126 = vld [vmem:[#allocation8 + $0x3c] sm:$0xf]
        %v2127 = vld [vmem:[%s6] sm:$0x1]
        %v2129 = vperm.slane %v2127, 0
        %v2147 = vunpack.c.l.b16 %v2111
        %v2148 = vunpack.c.l.b16 %v2112
        %v2149 = vunpack.c.l.b16 %v2113
        %v2150 = vunpack.c.l.b16 %v2114
        %v2151 = vunpack.c.l.b16 %v2115
        %v2152 = vunpack.c.l.b16 %v2116
        %v2153 = vunpack.c.l.b16 %v2117
        %v2154 = vunpack.c.l.b16 %v2118
        %v2155 = vunpack.c.l.b16 %v2119
        %v2156 = vunpack.c.l.b16 %v2120
        %v2157 = vunpack.c.l.b16 %v2121
        %v2158 = vunpack.c.l.b16 %v2122
        %v2159 = vunpack.c.l.b16 %v2123
        %v2160 = vunpack.c.l.b16 %v2124
        %v2161 = vunpack.c.l.b16 %v2125
        %v2162 = vunpack.c.l.b16 %v2126
        %v2163 = vpack.c.b16 %v2148, %v2147
        %v2164 = vpack.c.b16 %v2150, %v2149
        %v2165 = vpack.c.b16 %v2152, %v2151
        %v2166 = vpack.c.b16 %v2154, %v2153
        %v2167 = vpack.c.b16 %v2156, %v2155
        %v2168 = vpack.c.b16 %v2158, %v2157
        %v2169 = vpack.c.b16 %v2160, %v2159
        %v2170 = vpack.c.b16 %v2162, %v2161
        %2179 = vmatpush.bf16.msra.mxu0 %v2170
        %2180 = vmatpush.bf16.msra.mxu0 %v2169
        %2181 = vmatpush.bf16.msra.mxu0 %v2168
        %2182 = vmatpush.bf16.msra.mxu0 %v2167
        %2183 = vmatpush.bf16.msra.mxu0 %v2166
        %2184 = vmatpush.bf16.msra.mxu0 %v2165
        %2185 = vmatpush.bf16.msra.mxu0 %v2164
        %2186 = vmatpush.bf16.msra.mxu0 %v2163
        %2187 = vmatmul.bf16.gmra.mxu0 %v2095
        %v2188 = vpop.f32.mrf.mxu0
        %v2189 = vadd.f32 %v2129, %v2188
        %v2190 = vpop.f32.mrf.mxu0
        %v2191 = vadd.f32 %v2129, %v2190
        %2192 = vmatmul.bf16.gmra.mxu0 %v2096
        %v2193 = vpop.f32.mrf.mxu0
        %v2194 = vadd.f32 %v2129, %v2193
        %v2195 = vpop.f32.mrf.mxu0
        %v2196 = vadd.f32 %v2129, %v2195
        %2197 = vmatmul.bf16.gmra.mxu0 %v2097
        %v2198 = vpop.f32.mrf.mxu0
        %v2199 = vadd.f32 %v2129, %v2198
        %v2200 = vpop.f32.mrf.mxu0
        %v2201 = vadd.f32 %v2129, %v2200
        %2202 = vmatmul.bf16.gmra.mxu0 %v2098
        %v2203 = vpop.f32.mrf.mxu0
        %v2204 = vadd.f32 %v2129, %v2203
        %v2205 = vpop.f32.mrf.mxu0
        %v2206 = vadd.f32 %v2129, %v2205
        %2207 = vmatmul.bf16.gmra.mxu0 %v2099
        %v2208 = vpop.f32.mrf.mxu0
        %v2209 = vadd.f32 %v2129, %v2208
        %v2210 = vpop.f32.mrf.mxu0
        %v2211 = vadd.f32 %v2129, %v2210
        %2212 = vmatmul.bf16.gmra.mxu0 %v2100
        %v2213 = vpop.f32.mrf.mxu0
        %v2214 = vadd.f32 %v2129, %v2213
        %v2215 = vpop.f32.mrf.mxu0
        %v2216 = vadd.f32 %v2129, %v2215
        %2217 = vmatmul.bf16.gmra.mxu0 %v2101
        %v2218 = vpop.f32.mrf.mxu0
        %v2219 = vadd.f32 %v2129, %v2218
        %v2220 = vpop.f32.mrf.mxu0
        %v2221 = vadd.f32 %v2129, %v2220
        %2222 = vmatmul.bf16.gmra.mxu0 %v2102
        %v2223 = vpop.f32.mrf.mxu0
        %v2224 = vadd.f32 %v2129, %v2223
        %v2225 = vpop.f32.mrf.mxu0
        %v2226 = vadd.f32 %v2129, %v2225
        %2227 = vmatmul.bf16.gmra.mxu0 %v2103
        %v2228 = vpop.f32.mrf.mxu0
        %v2229 = vadd.f32 %v2129, %v2228
        %v2230 = vpop.f32.mrf.mxu0
        %v2231 = vadd.f32 %v2129, %v2230
        %2232 = vmatmul.bf16.gmra.mxu0 %v2104
        %v2233 = vpop.f32.mrf.mxu0
        %v2234 = vadd.f32 %v2129, %v2233
        %v2235 = vpop.f32.mrf.mxu0
        %v2236 = vadd.f32 %v2129, %v2235
        %2237 = vmatmul.bf16.gmra.mxu0 %v2105
        %v2238 = vpop.f32.mrf.mxu0
        %v2239 = vadd.f32 %v2129, %v2238
        %v2240 = vpop.f32.mrf.mxu0
        %v2241 = vadd.f32 %v2129, %v2240
        %2242 = vmatmul.bf16.gmra.mxu0 %v2106
        %v2243 = vpop.f32.mrf.mxu0
        %v2244 = vadd.f32 %v2129, %v2243
        %v2245 = vpop.f32.mrf.mxu0
        %v2246 = vadd.f32 %v2129, %v2245
        %2247 = vmatmul.bf16.gmra.mxu0 %v2107
        %v2248 = vpop.f32.mrf.mxu0
        %v2249 = vadd.f32 %v2129, %v2248
        %v2250 = vpop.f32.mrf.mxu0
        %v2251 = vadd.f32 %v2129, %v2250
        %2252 = vmatmul.bf16.gmra.mxu0 %v2108
        %v2253 = vpop.f32.mrf.mxu0
        %v2254 = vadd.f32 %v2129, %v2253
        %v2255 = vpop.f32.mrf.mxu0
        %v2256 = vadd.f32 %v2129, %v2255
        %2257 = vmatmul.bf16.gmra.mxu0 %v2109
        %v2258 = vpop.f32.mrf.mxu0
        %v2259 = vadd.f32 %v2129, %v2258
        %v2260 = vpop.f32.mrf.mxu0
        %v2261 = vadd.f32 %v2129, %v2260
        %2262 = vmatmul.bf16.gmra.mxu0 %v2110
        %v2263 = vpop.f32.mrf.mxu0
        %v2264 = vadd.f32 %v2129, %v2263
        %v2265 = vpop.f32.mrf.mxu0
        %v2266 = vadd.f32 %v2129, %v2265
        %2267 = vdwg.mxu0
        %v2268 = vxor.u32 %v2189, 2147483648
        %v2269 = vxor.u32 %v2191, 2147483648
        %v2270 = vxor.u32 %v2194, 2147483648
        %v2271 = vxor.u32 %v2196, 2147483648
        %v2272 = vxor.u32 %v2199, 2147483648
        %v2273 = vxor.u32 %v2201, 2147483648
        %v2274 = vxor.u32 %v2204, 2147483648
        %v2275 = vxor.u32 %v2206, 2147483648
        %v2276 = vxor.u32 %v2209, 2147483648
        %v2277 = vxor.u32 %v2211, 2147483648
        %v2278 = vxor.u32 %v2214, 2147483648
        %v2279 = vxor.u32 %v2216, 2147483648
        %v2280 = vxor.u32 %v2219, 2147483648
        %v2281 = vxor.u32 %v2221, 2147483648
        %v2282 = vxor.u32 %v2224, 2147483648
        %v2283 = vxor.u32 %v2226, 2147483648
        %v2284 = vxor.u32 %v2229, 2147483648
        %v2285 = vxor.u32 %v2231, 2147483648
        %v2286 = vxor.u32 %v2234, 2147483648
        %v2287 = vxor.u32 %v2236, 2147483648
        %v2288 = vxor.u32 %v2239, 2147483648
        %v2289 = vxor.u32 %v2241, 2147483648
        %v2290 = vxor.u32 %v2244, 2147483648
        %v2291 = vxor.u32 %v2246, 2147483648
        %v2292 = vxor.u32 %v2249, 2147483648
        %v2293 = vxor.u32 %v2251, 2147483648
        %v2294 = vxor.u32 %v2254, 2147483648
        %v2295 = vxor.u32 %v2256, 2147483648
        %v2296 = vxor.u32 %v2259, 2147483648
        %v2297 = vxor.u32 %v2261, 2147483648
        %v2298 = vxor.u32 %v2264, 2147483648
        %v2299 = vxor.u32 %v2266, 2147483648
        %v2300 = vmul.f32 %v2268, 1.442695
        %v2301 = vpow.pop %v2300
        %v2302 = vmul.f32 %v2269, 1.442695
        %v2303 = vpow.pop %v2302
        %v2304 = vmul.f32 %v2270, 1.442695
        %v2305 = vpow.pop %v2304
        %v2306 = vmul.f32 %v2271, 1.442695
        %v2307 = vpow.pop %v2306
        %v2308 = vmul.f32 %v2272, 1.442695
        %v2309 = vpow.pop %v2308
        %v2310 = vmul.f32 %v2273, 1.442695
        %v2311 = vpow.pop %v2310
        %v2312 = vmul.f32 %v2274, 1.442695
        %v2313 = vpow.pop %v2312
        %v2314 = vmul.f32 %v2275, 1.442695
        %v2315 = vpow.pop %v2314
        %v2316 = vmul.f32 %v2276, 1.442695
        %v2317 = vpow.pop %v2316
        %v2318 = vmul.f32 %v2277, 1.442695
        %v2319 = vpow.pop %v2318
        %v2320 = vmul.f32 %v2278, 1.442695
        %v2321 = vpow.pop %v2320
        %v2322 = vmul.f32 %v2279, 1.442695
        %v2323 = vpow.pop %v2322
        %v2324 = vmul.f32 %v2280, 1.442695
        %v2325 = vpow.pop %v2324
        %v2326 = vmul.f32 %v2281, 1.442695
        %v2327 = vpow.pop %v2326
        %v2328 = vmul.f32 %v2282, 1.442695
        %v2329 = vpow.pop %v2328
        %v2330 = vmul.f32 %v2283, 1.442695
        %v2331 = vpow.pop %v2330
        %v2332 = vmul.f32 %v2284, 1.442695
        %v2333 = vpow.pop %v2332
        %v2334 = vmul.f32 %v2285, 1.442695
        %v2335 = vpow.pop %v2334
        %v2336 = vmul.f32 %v2286, 1.442695
        %v2337 = vpow.pop %v2336
        %v2338 = vmul.f32 %v2287, 1.442695
        %v2339 = vpow.pop %v2338
        %v2340 = vmul.f32 %v2288, 1.442695
        %v2341 = vpow.pop %v2340
        %v2342 = vmul.f32 %v2289, 1.442695
        %v2343 = vpow.pop %v2342
        %v2344 = vmul.f32 %v2290, 1.442695
        %v2345 = vpow.pop %v2344
        %v2346 = vmul.f32 %v2291, 1.442695
        %v2347 = vpow.pop %v2346
        %v2348 = vmul.f32 %v2292, 1.442695
        %v2349 = vpow.pop %v2348
        %v2350 = vmul.f32 %v2293, 1.442695
        %v2351 = vpow.pop %v2350
        %v2352 = vmul.f32 %v2294, 1.442695
        %v2353 = vpow.pop %v2352
        %v2354 = vmul.f32 %v2295, 1.442695
        %v2355 = vpow.pop %v2354
        %v2356 = vmul.f32 %v2296, 1.442695
        %v2357 = vpow.pop %v2356
        %v2358 = vmul.f32 %v2297, 1.442695
        %v2359 = vpow.pop %v2358
        %v2360 = vmul.f32 %v2298, 1.442695
        %v2361 = vpow.pop %v2360
        %v2362 = vmul.f32 %v2299, 1.442695
        %v2363 = vpow.pop %v2362
        %v2364 = vadd.f32 %v2301, 1.0
        %v2365 = vadd.f32 %v2303, 1.0
        %v2366 = vadd.f32 %v2305, 1.0
        %v2367 = vadd.f32 %v2307, 1.0
        %v2368 = vadd.f32 %v2309, 1.0
        %v2369 = vadd.f32 %v2311, 1.0
        %v2370 = vadd.f32 %v2313, 1.0
        %v2371 = vadd.f32 %v2315, 1.0
        %v2372 = vadd.f32 %v2317, 1.0
        %v2373 = vadd.f32 %v2319, 1.0
        %v2374 = vadd.f32 %v2321, 1.0
        %v2375 = vadd.f32 %v2323, 1.0
        %v2376 = vadd.f32 %v2325, 1.0
        %v2377 = vadd.f32 %v2327, 1.0
        %v2378 = vadd.f32 %v2329, 1.0
        %v2379 = vadd.f32 %v2331, 1.0
        %v2380 = vadd.f32 %v2333, 1.0
        %v2381 = vadd.f32 %v2335, 1.0
        %v2382 = vadd.f32 %v2337, 1.0
        %v2383 = vadd.f32 %v2339, 1.0
        %v2384 = vadd.f32 %v2341, 1.0
        %v2385 = vadd.f32 %v2343, 1.0
        %v2386 = vadd.f32 %v2345, 1.0
        %v2387 = vadd.f32 %v2347, 1.0
        %v2388 = vadd.f32 %v2349, 1.0
        %v2389 = vadd.f32 %v2351, 1.0
        %v2390 = vadd.f32 %v2353, 1.0
        %v2391 = vadd.f32 %v2355, 1.0
        %v2392 = vadd.f32 %v2357, 1.0
        %v2393 = vadd.f32 %v2359, 1.0
        %v2394 = vadd.f32 %v2361, 1.0
        %v2395 = vadd.f32 %v2363, 1.0
        %v2396 = vrcp.pop %v2364
        %v2397 = vmul.f32 %v2364, %v2396
        %v2398 = vsub.f32 1.0, %v2397
        %v2399 = vmul.f32 %v2396, %v2398
        %v2400 = vadd.f32 %v2396, %v2399
        %vm2401 = vweird.f32 %v2364
        %vm2402 = vweird.f32 %v2396
        %vm2403 = vmor %vm2401, %vm2402
        %v2404 = vsel %vm2403, %v2396, %v2400
        %v2405 = vand.u32 2147483647, %v2364
        %vm2406 = vcmp.eq.f32.partialorder %v2405, 8.507059e+37
        %v2407 = vand.u32 %v2364, 2147483648
        %v2408 = vor.u32 1.1754944e-38, %v2407
        %v2409 = vsel %vm2406, %v2408, %v2404
        %v2410 = vmul.f32 1.0, %v2409
        %v2411 = vrcp.pop %v2365
        %v2412 = vmul.f32 %v2365, %v2411
        %v2413 = vsub.f32 1.0, %v2412
        %v2414 = vmul.f32 %v2411, %v2413
        %v2415 = vadd.f32 %v2411, %v2414
        %vm2416 = vweird.f32 %v2365
        %vm2417 = vweird.f32 %v2411
        %vm2418 = vmor %vm2416, %vm2417
        %v2419 = vsel %vm2418, %v2411, %v2415
        %v2420 = vand.u32 2147483647, %v2365
        %vm2421 = vcmp.eq.f32.partialorder %v2420, 8.507059e+37
        %v2422 = vand.u32 %v2365, 2147483648
        %v2423 = vor.u32 1.1754944e-38, %v2422
        %v2424 = vsel %vm2421, %v2423, %v2419
        %v2425 = vmul.f32 1.0, %v2424
        %v2426 = vrcp.pop %v2366
        %v2427 = vmul.f32 %v2366, %v2426
        %v2428 = vsub.f32 1.0, %v2427
        %v2429 = vmul.f32 %v2426, %v2428
        %v2430 = vadd.f32 %v2426, %v2429
        %vm2431 = vweird.f32 %v2366
        %vm2432 = vweird.f32 %v2426
        %vm2433 = vmor %vm2431, %vm2432
        %v2434 = vsel %vm2433, %v2426, %v2430
        %v2435 = vand.u32 2147483647, %v2366
        %vm2436 = vcmp.eq.f32.partialorder %v2435, 8.507059e+37
        %v2437 = vand.u32 %v2366, 2147483648
        %v2438 = vor.u32 1.1754944e-38, %v2437
        %v2439 = vsel %vm2436, %v2438, %v2434
        %v2440 = vmul.f32 1.0, %v2439
        %v2441 = vrcp.pop %v2367
        %v2442 = vmul.f32 %v2367, %v2441
        %v2443 = vsub.f32 1.0, %v2442
        %v2444 = vmul.f32 %v2441, %v2443
        %v2445 = vadd.f32 %v2441, %v2444
        %vm2446 = vweird.f32 %v2367
        %vm2447 = vweird.f32 %v2441
        %vm2448 = vmor %vm2446, %vm2447
        %v2449 = vsel %vm2448, %v2441, %v2445
        %v2450 = vand.u32 2147483647, %v2367
        %vm2451 = vcmp.eq.f32.partialorder %v2450, 8.507059e+37
        %v2452 = vand.u32 %v2367, 2147483648
        %v2453 = vor.u32 1.1754944e-38, %v2452
        %v2454 = vsel %vm2451, %v2453, %v2449
        %v2455 = vmul.f32 1.0, %v2454
        %v2456 = vrcp.pop %v2368
        %v2457 = vmul.f32 %v2368, %v2456
        %v2458 = vsub.f32 1.0, %v2457
        %v2459 = vmul.f32 %v2456, %v2458
        %v2460 = vadd.f32 %v2456, %v2459
        %vm2461 = vweird.f32 %v2368
        %vm2462 = vweird.f32 %v2456
        %vm2463 = vmor %vm2461, %vm2462
        %v2464 = vsel %vm2463, %v2456, %v2460
        %v2465 = vand.u32 2147483647, %v2368
        %vm2466 = vcmp.eq.f32.partialorder %v2465, 8.507059e+37
        %v2467 = vand.u32 %v2368, 2147483648
        %v2468 = vor.u32 1.1754944e-38, %v2467
        %v2469 = vsel %vm2466, %v2468, %v2464
        %v2470 = vmul.f32 1.0, %v2469
        %v2471 = vrcp.pop %v2369
        %v2472 = vmul.f32 %v2369, %v2471
        %v2473 = vsub.f32 1.0, %v2472
        %v2474 = vmul.f32 %v2471, %v2473
        %v2475 = vadd.f32 %v2471, %v2474
        %vm2476 = vweird.f32 %v2369
        %vm2477 = vweird.f32 %v2471
        %vm2478 = vmor %vm2476, %vm2477
        %v2479 = vsel %vm2478, %v2471, %v2475
        %v2480 = vand.u32 2147483647, %v2369
        %vm2481 = vcmp.eq.f32.partialorder %v2480, 8.507059e+37
        %v2482 = vand.u32 %v2369, 2147483648
        %v2483 = vor.u32 1.1754944e-38, %v2482
        %v2484 = vsel %vm2481, %v2483, %v2479
        %v2485 = vmul.f32 1.0, %v2484
        %v2486 = vrcp.pop %v2370
        %v2487 = vmul.f32 %v2370, %v2486
        %v2488 = vsub.f32 1.0, %v2487
        %v2489 = vmul.f32 %v2486, %v2488
        %v2490 = vadd.f32 %v2486, %v2489
        %vm2491 = vweird.f32 %v2370
        %vm2492 = vweird.f32 %v2486
        %vm2493 = vmor %vm2491, %vm2492
        %v2494 = vsel %vm2493, %v2486, %v2490
        %v2495 = vand.u32 2147483647, %v2370
        %vm2496 = vcmp.eq.f32.partialorder %v2495, 8.507059e+37
        %v2497 = vand.u32 %v2370, 2147483648
        %v2498 = vor.u32 1.1754944e-38, %v2497
        %v2499 = vsel %vm2496, %v2498, %v2494
        %v2500 = vmul.f32 1.0, %v2499
        %v2501 = vrcp.pop %v2371
        %v2502 = vmul.f32 %v2371, %v2501
        %v2503 = vsub.f32 1.0, %v2502
        %v2504 = vmul.f32 %v2501, %v2503
        %v2505 = vadd.f32 %v2501, %v2504
        %vm2506 = vweird.f32 %v2371
        %vm2507 = vweird.f32 %v2501
        %vm2508 = vmor %vm2506, %vm2507
        %v2509 = vsel %vm2508, %v2501, %v2505
        %v2510 = vand.u32 2147483647, %v2371
        %vm2511 = vcmp.eq.f32.partialorder %v2510, 8.507059e+37
        %v2512 = vand.u32 %v2371, 2147483648
        %v2513 = vor.u32 1.1754944e-38, %v2512
        %v2514 = vsel %vm2511, %v2513, %v2509
        %v2515 = vmul.f32 1.0, %v2514
        %v2516 = vrcp.pop %v2372
        %v2517 = vmul.f32 %v2372, %v2516
        %v2518 = vsub.f32 1.0, %v2517
        %v2519 = vmul.f32 %v2516, %v2518
        %v2520 = vadd.f32 %v2516, %v2519
        %vm2521 = vweird.f32 %v2372
        %vm2522 = vweird.f32 %v2516
        %vm2523 = vmor %vm2521, %vm2522
        %v2524 = vsel %vm2523, %v2516, %v2520
        %v2525 = vand.u32 2147483647, %v2372
        %vm2526 = vcmp.eq.f32.partialorder %v2525, 8.507059e+37
        %v2527 = vand.u32 %v2372, 2147483648
        %v2528 = vor.u32 1.1754944e-38, %v2527
        %v2529 = vsel %vm2526, %v2528, %v2524
        %v2530 = vmul.f32 1.0, %v2529
        %v2531 = vrcp.pop %v2373
        %v2532 = vmul.f32 %v2373, %v2531
        %v2533 = vsub.f32 1.0, %v2532
        %v2534 = vmul.f32 %v2531, %v2533
        %v2535 = vadd.f32 %v2531, %v2534
        %vm2536 = vweird.f32 %v2373
        %vm2537 = vweird.f32 %v2531
        %vm2538 = vmor %vm2536, %vm2537
        %v2539 = vsel %vm2538, %v2531, %v2535
        %v2540 = vand.u32 2147483647, %v2373
        %vm2541 = vcmp.eq.f32.partialorder %v2540, 8.507059e+37
        %v2542 = vand.u32 %v2373, 2147483648
        %v2543 = vor.u32 1.1754944e-38, %v2542
        %v2544 = vsel %vm2541, %v2543, %v2539
        %v2545 = vmul.f32 1.0, %v2544
        %v2546 = vrcp.pop %v2374
        %v2547 = vmul.f32 %v2374, %v2546
        %v2548 = vsub.f32 1.0, %v2547
        %v2549 = vmul.f32 %v2546, %v2548
        %v2550 = vadd.f32 %v2546, %v2549
        %vm2551 = vweird.f32 %v2374
        %vm2552 = vweird.f32 %v2546
        %vm2553 = vmor %vm2551, %vm2552
        %v2554 = vsel %vm2553, %v2546, %v2550
        %v2555 = vand.u32 2147483647, %v2374
        %vm2556 = vcmp.eq.f32.partialorder %v2555, 8.507059e+37
        %v2557 = vand.u32 %v2374, 2147483648
        %v2558 = vor.u32 1.1754944e-38, %v2557
        %v2559 = vsel %vm2556, %v2558, %v2554
        %v2560 = vmul.f32 1.0, %v2559
        %v2561 = vrcp.pop %v2375
        %v2562 = vmul.f32 %v2375, %v2561
        %v2563 = vsub.f32 1.0, %v2562
        %v2564 = vmul.f32 %v2561, %v2563
        %v2565 = vadd.f32 %v2561, %v2564
        %vm2566 = vweird.f32 %v2375
        %vm2567 = vweird.f32 %v2561
        %vm2568 = vmor %vm2566, %vm2567
        %v2569 = vsel %vm2568, %v2561, %v2565
        %v2570 = vand.u32 2147483647, %v2375
        %vm2571 = vcmp.eq.f32.partialorder %v2570, 8.507059e+37
        %v2572 = vand.u32 %v2375, 2147483648
        %v2573 = vor.u32 1.1754944e-38, %v2572
        %v2574 = vsel %vm2571, %v2573, %v2569
        %v2575 = vmul.f32 1.0, %v2574
        %v2576 = vrcp.pop %v2376
        %v2577 = vmul.f32 %v2376, %v2576
        %v2578 = vsub.f32 1.0, %v2577
        %v2579 = vmul.f32 %v2576, %v2578
        %v2580 = vadd.f32 %v2576, %v2579
        %vm2581 = vweird.f32 %v2376
        %vm2582 = vweird.f32 %v2576
        %vm2583 = vmor %vm2581, %vm2582
        %v2584 = vsel %vm2583, %v2576, %v2580
        %v2585 = vand.u32 2147483647, %v2376
        %vm2586 = vcmp.eq.f32.partialorder %v2585, 8.507059e+37
        %v2587 = vand.u32 %v2376, 2147483648
        %v2588 = vor.u32 1.1754944e-38, %v2587
        %v2589 = vsel %vm2586, %v2588, %v2584
        %v2590 = vmul.f32 1.0, %v2589
        %v2591 = vrcp.pop %v2377
        %v2592 = vmul.f32 %v2377, %v2591
        %v2593 = vsub.f32 1.0, %v2592
        %v2594 = vmul.f32 %v2591, %v2593
        %v2595 = vadd.f32 %v2591, %v2594
        %vm2596 = vweird.f32 %v2377
        %vm2597 = vweird.f32 %v2591
        %vm2598 = vmor %vm2596, %vm2597
        %v2599 = vsel %vm2598, %v2591, %v2595
        %v2600 = vand.u32 2147483647, %v2377
        %vm2601 = vcmp.eq.f32.partialorder %v2600, 8.507059e+37
        %v2602 = vand.u32 %v2377, 2147483648
        %v2603 = vor.u32 1.1754944e-38, %v2602
        %v2604 = vsel %vm2601, %v2603, %v2599
        %v2605 = vmul.f32 1.0, %v2604
        %v2606 = vrcp.pop %v2378
        %v2607 = vmul.f32 %v2378, %v2606
        %v2608 = vsub.f32 1.0, %v2607
        %v2609 = vmul.f32 %v2606, %v2608
        %v2610 = vadd.f32 %v2606, %v2609
        %vm2611 = vweird.f32 %v2378
        %vm2612 = vweird.f32 %v2606
        %vm2613 = vmor %vm2611, %vm2612
        %v2614 = vsel %vm2613, %v2606, %v2610
        %v2615 = vand.u32 2147483647, %v2378
        %vm2616 = vcmp.eq.f32.partialorder %v2615, 8.507059e+37
        %v2617 = vand.u32 %v2378, 2147483648
        %v2618 = vor.u32 1.1754944e-38, %v2617
        %v2619 = vsel %vm2616, %v2618, %v2614
        %v2620 = vmul.f32 1.0, %v2619
        %v2621 = vrcp.pop %v2379
        %v2622 = vmul.f32 %v2379, %v2621
        %v2623 = vsub.f32 1.0, %v2622
        %v2624 = vmul.f32 %v2621, %v2623
        %v2625 = vadd.f32 %v2621, %v2624
        %vm2626 = vweird.f32 %v2379
        %vm2627 = vweird.f32 %v2621
        %vm2628 = vmor %vm2626, %vm2627
        %v2629 = vsel %vm2628, %v2621, %v2625
        %v2630 = vand.u32 2147483647, %v2379
        %vm2631 = vcmp.eq.f32.partialorder %v2630, 8.507059e+37
        %v2632 = vand.u32 %v2379, 2147483648
        %v2633 = vor.u32 1.1754944e-38, %v2632
        %v2634 = vsel %vm2631, %v2633, %v2629
        %v2635 = vmul.f32 1.0, %v2634
        %v2636 = vrcp.pop %v2380
        %v2637 = vmul.f32 %v2380, %v2636
        %v2638 = vsub.f32 1.0, %v2637
        %v2639 = vmul.f32 %v2636, %v2638
        %v2640 = vadd.f32 %v2636, %v2639
        %vm2641 = vweird.f32 %v2380
        %vm2642 = vweird.f32 %v2636
        %vm2643 = vmor %vm2641, %vm2642
        %v2644 = vsel %vm2643, %v2636, %v2640
        %v2645 = vand.u32 2147483647, %v2380
        %vm2646 = vcmp.eq.f32.partialorder %v2645, 8.507059e+37
        %v2647 = vand.u32 %v2380, 2147483648
        %v2648 = vor.u32 1.1754944e-38, %v2647
        %v2649 = vsel %vm2646, %v2648, %v2644
        %v2650 = vmul.f32 1.0, %v2649
        %v2651 = vrcp.pop %v2381
        %v2652 = vmul.f32 %v2381, %v2651
        %v2653 = vsub.f32 1.0, %v2652
        %v2654 = vmul.f32 %v2651, %v2653
        %v2655 = vadd.f32 %v2651, %v2654
        %vm2656 = vweird.f32 %v2381
        %vm2657 = vweird.f32 %v2651
        %vm2658 = vmor %vm2656, %vm2657
        %v2659 = vsel %vm2658, %v2651, %v2655
        %v2660 = vand.u32 2147483647, %v2381
        %vm2661 = vcmp.eq.f32.partialorder %v2660, 8.507059e+37
        %v2662 = vand.u32 %v2381, 2147483648
        %v2663 = vor.u32 1.1754944e-38, %v2662
        %v2664 = vsel %vm2661, %v2663, %v2659
        %v2665 = vmul.f32 1.0, %v2664
        %v2666 = vrcp.pop %v2382
        %v2667 = vmul.f32 %v2382, %v2666
        %v2668 = vsub.f32 1.0, %v2667
        %v2669 = vmul.f32 %v2666, %v2668
        %v2670 = vadd.f32 %v2666, %v2669
        %vm2671 = vweird.f32 %v2382
        %vm2672 = vweird.f32 %v2666
        %vm2673 = vmor %vm2671, %vm2672
        %v2674 = vsel %vm2673, %v2666, %v2670
        %v2675 = vand.u32 2147483647, %v2382
        %vm2676 = vcmp.eq.f32.partialorder %v2675, 8.507059e+37
        %v2677 = vand.u32 %v2382, 2147483648
        %v2678 = vor.u32 1.1754944e-38, %v2677
        %v2679 = vsel %vm2676, %v2678, %v2674
        %v2680 = vmul.f32 1.0, %v2679
        %v2681 = vrcp.pop %v2383
        %v2682 = vmul.f32 %v2383, %v2681
        %v2683 = vsub.f32 1.0, %v2682
        %v2684 = vmul.f32 %v2681, %v2683
        %v2685 = vadd.f32 %v2681, %v2684
        %vm2686 = vweird.f32 %v2383
        %vm2687 = vweird.f32 %v2681
        %vm2688 = vmor %vm2686, %vm2687
        %v2689 = vsel %vm2688, %v2681, %v2685
        %v2690 = vand.u32 2147483647, %v2383
        %vm2691 = vcmp.eq.f32.partialorder %v2690, 8.507059e+37
        %v2692 = vand.u32 %v2383, 2147483648
        %v2693 = vor.u32 1.1754944e-38, %v2692
        %v2694 = vsel %vm2691, %v2693, %v2689
        %v2695 = vmul.f32 1.0, %v2694
        %v2696 = vrcp.pop %v2384
        %v2697 = vmul.f32 %v2384, %v2696
        %v2698 = vsub.f32 1.0, %v2697
        %v2699 = vmul.f32 %v2696, %v2698
        %v2700 = vadd.f32 %v2696, %v2699
        %vm2701 = vweird.f32 %v2384
        %vm2702 = vweird.f32 %v2696
        %vm2703 = vmor %vm2701, %vm2702
        %v2704 = vsel %vm2703, %v2696, %v2700
        %v2705 = vand.u32 2147483647, %v2384
        %vm2706 = vcmp.eq.f32.partialorder %v2705, 8.507059e+37
        %v2707 = vand.u32 %v2384, 2147483648
        %v2708 = vor.u32 1.1754944e-38, %v2707
        %v2709 = vsel %vm2706, %v2708, %v2704
        %v2710 = vmul.f32 1.0, %v2709
        %v2711 = vrcp.pop %v2385
        %v2712 = vmul.f32 %v2385, %v2711
        %v2713 = vsub.f32 1.0, %v2712
        %v2714 = vmul.f32 %v2711, %v2713
        %v2715 = vadd.f32 %v2711, %v2714
        %vm2716 = vweird.f32 %v2385
        %vm2717 = vweird.f32 %v2711
        %vm2718 = vmor %vm2716, %vm2717
        %v2719 = vsel %vm2718, %v2711, %v2715
        %v2720 = vand.u32 2147483647, %v2385
        %vm2721 = vcmp.eq.f32.partialorder %v2720, 8.507059e+37
        %v2722 = vand.u32 %v2385, 2147483648
        %v2723 = vor.u32 1.1754944e-38, %v2722
        %v2724 = vsel %vm2721, %v2723, %v2719
        %v2725 = vmul.f32 1.0, %v2724
        %v2726 = vrcp.pop %v2386
        %v2727 = vmul.f32 %v2386, %v2726
        %v2728 = vsub.f32 1.0, %v2727
        %v2729 = vmul.f32 %v2726, %v2728
        %v2730 = vadd.f32 %v2726, %v2729
        %vm2731 = vweird.f32 %v2386
        %vm2732 = vweird.f32 %v2726
        %vm2733 = vmor %vm2731, %vm2732
        %v2734 = vsel %vm2733, %v2726, %v2730
        %v2735 = vand.u32 2147483647, %v2386
        %vm2736 = vcmp.eq.f32.partialorder %v2735, 8.507059e+37
        %v2737 = vand.u32 %v2386, 2147483648
        %v2738 = vor.u32 1.1754944e-38, %v2737
        %v2739 = vsel %vm2736, %v2738, %v2734
        %v2740 = vmul.f32 1.0, %v2739
        %v2741 = vrcp.pop %v2387
        %v2742 = vmul.f32 %v2387, %v2741
        %v2743 = vsub.f32 1.0, %v2742
        %v2744 = vmul.f32 %v2741, %v2743
        %v2745 = vadd.f32 %v2741, %v2744
        %vm2746 = vweird.f32 %v2387
        %vm2747 = vweird.f32 %v2741
        %vm2748 = vmor %vm2746, %vm2747
        %v2749 = vsel %vm2748, %v2741, %v2745
        %v2750 = vand.u32 2147483647, %v2387
        %vm2751 = vcmp.eq.f32.partialorder %v2750, 8.507059e+37
        %v2752 = vand.u32 %v2387, 2147483648
        %v2753 = vor.u32 1.1754944e-38, %v2752
        %v2754 = vsel %vm2751, %v2753, %v2749
        %v2755 = vmul.f32 1.0, %v2754
        %v2756 = vrcp.pop %v2388
        %v2757 = vmul.f32 %v2388, %v2756
        %v2758 = vsub.f32 1.0, %v2757
        %v2759 = vmul.f32 %v2756, %v2758
        %v2760 = vadd.f32 %v2756, %v2759
        %vm2761 = vweird.f32 %v2388
        %vm2762 = vweird.f32 %v2756
        %vm2763 = vmor %vm2761, %vm2762
        %v2764 = vsel %vm2763, %v2756, %v2760
        %v2765 = vand.u32 2147483647, %v2388
        %vm2766 = vcmp.eq.f32.partialorder %v2765, 8.507059e+37
        %v2767 = vand.u32 %v2388, 2147483648
        %v2768 = vor.u32 1.1754944e-38, %v2767
        %v2769 = vsel %vm2766, %v2768, %v2764
        %v2770 = vmul.f32 1.0, %v2769
        %v2771 = vrcp.pop %v2389
        %v2772 = vmul.f32 %v2389, %v2771
        %v2773 = vsub.f32 1.0, %v2772
        %v2774 = vmul.f32 %v2771, %v2773
        %v2775 = vadd.f32 %v2771, %v2774
        %vm2776 = vweird.f32 %v2389
        %vm2777 = vweird.f32 %v2771
        %vm2778 = vmor %vm2776, %vm2777
        %v2779 = vsel %vm2778, %v2771, %v2775
        %v2780 = vand.u32 2147483647, %v2389
        %vm2781 = vcmp.eq.f32.partialorder %v2780, 8.507059e+37
        %v2782 = vand.u32 %v2389, 2147483648
        %v2783 = vor.u32 1.1754944e-38, %v2782
        %v2784 = vsel %vm2781, %v2783, %v2779
        %v2785 = vmul.f32 1.0, %v2784
        %v2786 = vrcp.pop %v2390
        %v2787 = vmul.f32 %v2390, %v2786
        %v2788 = vsub.f32 1.0, %v2787
        %v2789 = vmul.f32 %v2786, %v2788
        %v2790 = vadd.f32 %v2786, %v2789
        %vm2791 = vweird.f32 %v2390
        %vm2792 = vweird.f32 %v2786
        %vm2793 = vmor %vm2791, %vm2792
        %v2794 = vsel %vm2793, %v2786, %v2790
        %v2795 = vand.u32 2147483647, %v2390
        %vm2796 = vcmp.eq.f32.partialorder %v2795, 8.507059e+37
        %v2797 = vand.u32 %v2390, 2147483648
        %v2798 = vor.u32 1.1754944e-38, %v2797
        %v2799 = vsel %vm2796, %v2798, %v2794
        %v2800 = vmul.f32 1.0, %v2799
        %v2801 = vrcp.pop %v2391
        %v2802 = vmul.f32 %v2391, %v2801
        %v2803 = vsub.f32 1.0, %v2802
        %v2804 = vmul.f32 %v2801, %v2803
        %v2805 = vadd.f32 %v2801, %v2804
        %vm2806 = vweird.f32 %v2391
        %vm2807 = vweird.f32 %v2801
        %vm2808 = vmor %vm2806, %vm2807
        %v2809 = vsel %vm2808, %v2801, %v2805
        %v2810 = vand.u32 2147483647, %v2391
        %vm2811 = vcmp.eq.f32.partialorder %v2810, 8.507059e+37
        %v2812 = vand.u32 %v2391, 2147483648
        %v2813 = vor.u32 1.1754944e-38, %v2812
        %v2814 = vsel %vm2811, %v2813, %v2809
        %v2815 = vmul.f32 1.0, %v2814
        %v2816 = vrcp.pop %v2392
        %v2817 = vmul.f32 %v2392, %v2816
        %v2818 = vsub.f32 1.0, %v2817
        %v2819 = vmul.f32 %v2816, %v2818
        %v2820 = vadd.f32 %v2816, %v2819
        %vm2821 = vweird.f32 %v2392
        %vm2822 = vweird.f32 %v2816
        %vm2823 = vmor %vm2821, %vm2822
        %v2824 = vsel %vm2823, %v2816, %v2820
        %v2825 = vand.u32 2147483647, %v2392
        %vm2826 = vcmp.eq.f32.partialorder %v2825, 8.507059e+37
        %v2827 = vand.u32 %v2392, 2147483648
        %v2828 = vor.u32 1.1754944e-38, %v2827
        %v2829 = vsel %vm2826, %v2828, %v2824
        %v2830 = vmul.f32 1.0, %v2829
        %v2831 = vrcp.pop %v2393
        %v2832 = vmul.f32 %v2393, %v2831
        %v2833 = vsub.f32 1.0, %v2832
        %v2834 = vmul.f32 %v2831, %v2833
        %v2835 = vadd.f32 %v2831, %v2834
        %vm2836 = vweird.f32 %v2393
        %vm2837 = vweird.f32 %v2831
        %vm2838 = vmor %vm2836, %vm2837
        %v2839 = vsel %vm2838, %v2831, %v2835
        %v2840 = vand.u32 2147483647, %v2393
        %vm2841 = vcmp.eq.f32.partialorder %v2840, 8.507059e+37
        %v2842 = vand.u32 %v2393, 2147483648
        %v2843 = vor.u32 1.1754944e-38, %v2842
        %v2844 = vsel %vm2841, %v2843, %v2839
        %v2845 = vmul.f32 1.0, %v2844
        %v2846 = vrcp.pop %v2394
        %v2847 = vmul.f32 %v2394, %v2846
        %v2848 = vsub.f32 1.0, %v2847
        %v2849 = vmul.f32 %v2846, %v2848
        %v2850 = vadd.f32 %v2846, %v2849
        %vm2851 = vweird.f32 %v2394
        %vm2852 = vweird.f32 %v2846
        %vm2853 = vmor %vm2851, %vm2852
        %v2854 = vsel %vm2853, %v2846, %v2850
        %v2855 = vand.u32 2147483647, %v2394
        %vm2856 = vcmp.eq.f32.partialorder %v2855, 8.507059e+37
        %v2857 = vand.u32 %v2394, 2147483648
        %v2858 = vor.u32 1.1754944e-38, %v2857
        %v2859 = vsel %vm2856, %v2858, %v2854
        %v2860 = vmul.f32 1.0, %v2859
        %v2861 = vrcp.pop %v2395
        %v2862 = vmul.f32 %v2395, %v2861
        %v2863 = vsub.f32 1.0, %v2862
        %v2864 = vmul.f32 %v2861, %v2863
        %v2865 = vadd.f32 %v2861, %v2864
        %vm2866 = vweird.f32 %v2395
        %vm2867 = vweird.f32 %v2861
        %vm2868 = vmor %vm2866, %vm2867
        %v2869 = vsel %vm2868, %v2861, %v2865
        %v2870 = vand.u32 2147483647, %v2395
        %vm2871 = vcmp.eq.f32.partialorder %v2870, 8.507059e+37
        %v2872 = vand.u32 %v2395, 2147483648
        %v2873 = vor.u32 1.1754944e-38, %v2872
        %v2874 = vsel %vm2871, %v2873, %v2869
        %v2875 = vmul.f32 1.0, %v2874
        %v2876 = vpack.c.bf16 %v2425, %v2410
        %v2877 = vpack.c.bf16 %v2455, %v2440
        %v2878 = vpack.c.bf16 %v2485, %v2470
        %v2879 = vpack.c.bf16 %v2515, %v2500
        %v2880 = vpack.c.bf16 %v2545, %v2530
        %v2881 = vpack.c.bf16 %v2575, %v2560
        %v2882 = vpack.c.bf16 %v2605, %v2590
        %v2883 = vpack.c.bf16 %v2635, %v2620
        %v2884 = vpack.c.bf16 %v2665, %v2650
        %v2885 = vpack.c.bf16 %v2695, %v2680
        %v2886 = vpack.c.bf16 %v2725, %v2710
        %v2887 = vpack.c.bf16 %v2755, %v2740
        %v2888 = vpack.c.bf16 %v2785, %v2770
        %v2889 = vpack.c.bf16 %v2815, %v2800
        %v2890 = vpack.c.bf16 %v2845, %v2830
        %v2891 = vpack.c.bf16 %v2875, %v2860
        %v2892 = vld [vmem:[#allocation10] sm:$0xf]
        %v2893 = vld [vmem:[#allocation10 + $0x4] sm:$0xf]
        %v2894 = vld [vmem:[#allocation10 + $0x8] sm:$0xf]
        %v2895 = vld [vmem:[#allocation10 + $0xc] sm:$0xf]
        %v2896 = vld [vmem:[#allocation10 + $0x10] sm:$0xf]
        %v2897 = vld [vmem:[#allocation10 + $0x14] sm:$0xf]
        %v2898 = vld [vmem:[#allocation10 + $0x18] sm:$0xf]
        %v2899 = vld [vmem:[#allocation10 + $0x1c] sm:$0xf]
        %v2900 = vld [vmem:[#allocation10 + $0x20] sm:$0xf]
        %v2901 = vld [vmem:[#allocation10 + $0x24] sm:$0xf]
        %v2902 = vld [vmem:[#allocation10 + $0x28] sm:$0xf]
        %v2903 = vld [vmem:[#allocation10 + $0x2c] sm:$0xf]
        %v2904 = vld [vmem:[#allocation10 + $0x30] sm:$0xf]
        %v2905 = vld [vmem:[#allocation10 + $0x34] sm:$0xf]
        %v2906 = vld [vmem:[#allocation10 + $0x38] sm:$0xf]
        %v2907 = vld [vmem:[#allocation10 + $0x3c] sm:$0xf]
        %v2908 = vld [vmem:[%s8] sm:$0x1]
        %v2910 = vperm.slane %v2908, 0
        %v2928 = vunpack.c.l.b16 %v2892
        %v2929 = vunpack.c.l.b16 %v2893
        %v2930 = vunpack.c.l.b16 %v2894
        %v2931 = vunpack.c.l.b16 %v2895
        %v2932 = vunpack.c.l.b16 %v2896
        %v2933 = vunpack.c.l.b16 %v2897
        %v2934 = vunpack.c.l.b16 %v2898
        %v2935 = vunpack.c.l.b16 %v2899
        %v2936 = vunpack.c.l.b16 %v2900
        %v2937 = vunpack.c.l.b16 %v2901
        %v2938 = vunpack.c.l.b16 %v2902
        %v2939 = vunpack.c.l.b16 %v2903
        %v2940 = vunpack.c.l.b16 %v2904
        %v2941 = vunpack.c.l.b16 %v2905
        %v2942 = vunpack.c.l.b16 %v2906
        %v2943 = vunpack.c.l.b16 %v2907
        %v2944 = vpack.c.b16 %v2929, %v2928
        %v2945 = vpack.c.b16 %v2931, %v2930
        %v2946 = vpack.c.b16 %v2933, %v2932
        %v2947 = vpack.c.b16 %v2935, %v2934
        %v2948 = vpack.c.b16 %v2937, %v2936
        %v2949 = vpack.c.b16 %v2939, %v2938
        %v2950 = vpack.c.b16 %v2941, %v2940
        %v2951 = vpack.c.b16 %v2943, %v2942
        %2960 = vmatpush.bf16.msra.mxu0 %v2951
        %2961 = vmatpush.bf16.msra.mxu0 %v2950
        %2962 = vmatpush.bf16.msra.mxu0 %v2949
        %2963 = vmatpush.bf16.msra.mxu0 %v2948
        %2964 = vmatpush.bf16.msra.mxu0 %v2947
        %2965 = vmatpush.bf16.msra.mxu0 %v2946
        %2966 = vmatpush.bf16.msra.mxu0 %v2945
        %2967 = vmatpush.bf16.msra.mxu0 %v2944
        %2968 = vmatmul.bf16.gmra.mxu0 %v2876
        %v2969 = vpop.f32.mrf.mxu0
        %v2970 = vadd.f32 %v2910, %v2969
        %v2971 = vpop.f32.mrf.mxu0
        %v2972 = vadd.f32 %v2910, %v2971
        %2973 = vmatmul.bf16.gmra.mxu0 %v2877
        %v2974 = vpop.f32.mrf.mxu0
        %v2975 = vadd.f32 %v2910, %v2974
        %v2976 = vpop.f32.mrf.mxu0
        %v2977 = vadd.f32 %v2910, %v2976
        %2978 = vmatmul.bf16.gmra.mxu0 %v2878
        %v2979 = vpop.f32.mrf.mxu0
        %v2980 = vadd.f32 %v2910, %v2979
        %v2981 = vpop.f32.mrf.mxu0
        %v2982 = vadd.f32 %v2910, %v2981
        %2983 = vmatmul.bf16.gmra.mxu0 %v2879
        %v2984 = vpop.f32.mrf.mxu0
        %v2985 = vadd.f32 %v2910, %v2984
        %v2986 = vpop.f32.mrf.mxu0
        %v2987 = vadd.f32 %v2910, %v2986
        %2988 = vmatmul.bf16.gmra.mxu0 %v2880
        %v2989 = vpop.f32.mrf.mxu0
        %v2990 = vadd.f32 %v2910, %v2989
        %v2991 = vpop.f32.mrf.mxu0
        %v2992 = vadd.f32 %v2910, %v2991
        %2993 = vmatmul.bf16.gmra.mxu0 %v2881
        %v2994 = vpop.f32.mrf.mxu0
        %v2995 = vadd.f32 %v2910, %v2994
        %v2996 = vpop.f32.mrf.mxu0
        %v2997 = vadd.f32 %v2910, %v2996
        %2998 = vmatmul.bf16.gmra.mxu0 %v2882
        %v2999 = vpop.f32.mrf.mxu0
        %v3000 = vadd.f32 %v2910, %v2999
        %v3001 = vpop.f32.mrf.mxu0
        %v3002 = vadd.f32 %v2910, %v3001
        %3003 = vmatmul.bf16.gmra.mxu0 %v2883
        %v3004 = vpop.f32.mrf.mxu0
        %v3005 = vadd.f32 %v2910, %v3004
        %v3006 = vpop.f32.mrf.mxu0
        %v3007 = vadd.f32 %v2910, %v3006
        %3008 = vmatmul.bf16.gmra.mxu0 %v2884
        %v3009 = vpop.f32.mrf.mxu0
        %v3010 = vadd.f32 %v2910, %v3009
        %v3011 = vpop.f32.mrf.mxu0
        %v3012 = vadd.f32 %v2910, %v3011
        %3013 = vmatmul.bf16.gmra.mxu0 %v2885
        %v3014 = vpop.f32.mrf.mxu0
        %v3015 = vadd.f32 %v2910, %v3014
        %v3016 = vpop.f32.mrf.mxu0
        %v3017 = vadd.f32 %v2910, %v3016
        %3018 = vmatmul.bf16.gmra.mxu0 %v2886
        %v3019 = vpop.f32.mrf.mxu0
        %v3020 = vadd.f32 %v2910, %v3019
        %v3021 = vpop.f32.mrf.mxu0
        %v3022 = vadd.f32 %v2910, %v3021
        %3023 = vmatmul.bf16.gmra.mxu0 %v2887
        %v3024 = vpop.f32.mrf.mxu0
        %v3025 = vadd.f32 %v2910, %v3024
        %v3026 = vpop.f32.mrf.mxu0
        %v3027 = vadd.f32 %v2910, %v3026
        %3028 = vmatmul.bf16.gmra.mxu0 %v2888
        %v3029 = vpop.f32.mrf.mxu0
        %v3030 = vadd.f32 %v2910, %v3029
        %v3031 = vpop.f32.mrf.mxu0
        %v3032 = vadd.f32 %v2910, %v3031
        %3033 = vmatmul.bf16.gmra.mxu0 %v2889
        %v3034 = vpop.f32.mrf.mxu0
        %v3035 = vadd.f32 %v2910, %v3034
        %v3036 = vpop.f32.mrf.mxu0
        %v3037 = vadd.f32 %v2910, %v3036
        %3038 = vmatmul.bf16.gmra.mxu0 %v2890
        %v3039 = vpop.f32.mrf.mxu0
        %v3040 = vadd.f32 %v2910, %v3039
        %v3041 = vpop.f32.mrf.mxu0
        %v3042 = vadd.f32 %v2910, %v3041
        %3043 = vmatmul.bf16.gmra.mxu0 %v2891
        %v3044 = vpop.f32.mrf.mxu0
        %v3045 = vadd.f32 %v2910, %v3044
        %v3046 = vpop.f32.mrf.mxu0
        %v3047 = vadd.f32 %v2910, %v3046
        %3048 = vdwg.mxu0
        %3049 = vst [vmem:[%s418] sm:$0xff] %v2970
        %3050 = vst [vmem:[%s418 + $0x8] sm:$0xff] %v2972
        %3051 = vst [vmem:[%s418 + $0x10] sm:$0xff] %v2975
        %3052 = vst [vmem:[%s418 + $0x18] sm:$0xff] %v2977
        %3053 = vst [vmem:[%s418 + $0x20] sm:$0xff] %v2980
        %3054 = vst [vmem:[%s418 + $0x28] sm:$0xff] %v2982
        %3055 = vst [vmem:[%s418 + $0x30] sm:$0xff] %v2985
        %3056 = vst [vmem:[%s418 + $0x38] sm:$0xff] %v2987
        %3057 = vst [vmem:[%s418 + $0x40] sm:$0xff] %v2990
        %3058 = vst [vmem:[%s418 + $0x48] sm:$0xff] %v2992
        %3059 = vst [vmem:[%s418 + $0x50] sm:$0xff] %v2995
        %3060 = vst [vmem:[%s418 + $0x58] sm:$0xff] %v2997
        %3061 = vst [vmem:[%s418 + $0x60] sm:$0xff] %v3000
        %3062 = vst [vmem:[%s418 + $0x68] sm:$0xff] %v3002
        %3063 = vst [vmem:[%s418 + $0x70] sm:$0xff] %v3005
        %3064 = vst [vmem:[%s418 + $0x78] sm:$0xff] %v3007
        %3065 = vst [vmem:[%s418 + $0x80] sm:$0xff] %v3010
        %3066 = vst [vmem:[%s418 + $0x88] sm:$0xff] %v3012
        %3067 = vst [vmem:[%s418 + $0x90] sm:$0xff] %v3015
        %3068 = vst [vmem:[%s418 + $0x98] sm:$0xff] %v3017
        %3069 = vst [vmem:[%s418 + $0xa0] sm:$0xff] %v3020
        %3070 = vst [vmem:[%s418 + $0xa8] sm:$0xff] %v3022
        %3071 = vst [vmem:[%s418 + $0xb0] sm:$0xff] %v3025
        %3072 = vst [vmem:[%s418 + $0xb8] sm:$0xff] %v3027
        %3073 = vst [vmem:[%s418 + $0xc0] sm:$0xff] %v3030
        %3074 = vst [vmem:[%s418 + $0xc8] sm:$0xff] %v3032
        %3075 = vst [vmem:[%s418 + $0xd0] sm:$0xff] %v3035
        %3076 = vst [vmem:[%s418 + $0xd8] sm:$0xff] %v3037
        %3077 = vst [vmem:[%s418 + $0xe0] sm:$0xff] %v3040
        %3078 = vst [vmem:[%s418 + $0xe8] sm:$0xff] %v3042
        %3079 = vst [vmem:[%s418 + $0xf0] sm:$0xff] %v3045
        %3080 = vst [vmem:[%s418 + $0xf8] sm:$0xff] %v3047
        %s3081 = sand.u32 %s230, 1
        %s3082 = scalar_lea.sflag [#allocation4], %s3081
        %s3083 = sand.u32 %s230, 1
        %s3084 = smul.addr %s3083, 256
        %s3085 = scalar_lea.vmem [#allocation11], %s3084
        // Predicated region
        $region77: #{tpu_custom_call.1} parent=55 // pred_check
          %p3086 = pneg %p240
        $region78: #{tpu_custom_call.1} parent=55 // pred_check_branch
          %3088 = sbr.rel (%p3086) target = $region80
        $region79: #{tpu_custom_call.1} parent=55 // pred_region
          %s3089 = smul.u32 32, %s28
          %3091 = vsyncadd %s3082, 0
          %s3092 = smul.addr %s3089, 8
          %s3093 = scalar_lea.hbm %s9, %s3092
          %s3094 = sshll.u32 %s3085, 4
          %s3095 = int_to_ptr.vmem [resolvable:$true] %s3094
          %s3096 = sshll.u32 %s3093, 4
          %s3097 = int_to_ptr.hbm [resolvable:$true] %s3096
          %3102 = dma.vmem_to_hbm [thread:$0]  %s3095, 4096, %s3097, %s3082, 128, 128, 8
        $region80: #{tpu_custom_call.1} parent=55 // pred_fallthru
          _
      $region56: #{tpu_custom_call.1} parent=5 // pred_fallthru
        _
      %p3103 = scmp.le.s32.totalorder 2, %s23
      // Predicated region
      $region81: #{tpu_custom_call.1} parent=5 // pred_check
        %p3104 = pneg %p3103
      $region82: #{tpu_custom_call.1} parent=5 // pred_check_branch
        %3106 = sbr.rel (%p3104) target = $region84
      $region83: #{tpu_custom_call.1} parent=5 // pred_region
        %s3107 = ssub.s32 %s23, 2
        // Predicated region
        $region85: #{tpu_custom_call.1} parent=83 // pred_check
          %p3108 = pneg %p246
        $region86: #{tpu_custom_call.1} parent=83 // pred_check_branch
          %3110 = sbr.rel (%p3108) target = $region88
        $region87: #{tpu_custom_call.1} parent=83 // pred_region
          %s3111 = sand.u32 %s231, 1
          %s3112 = scalar_lea.sflag [#allocation4], %s3111
          %s3113 = sand.u32 %s231, 1
          %s3114 = smul.addr %s3113, 256
          %s3115 = scalar_lea.vmem [#allocation11], %s3114
          %3117 = dma.done %s3112, 4096
        $region88: #{tpu_custom_call.1} parent=83 // pred_fallthru
          _
      $region84: #{tpu_custom_call.1} parent=5 // pred_fallthru
        _
    $region6: #{tpu_custom_call.1} parent=1 // loop_footer
      %s27 = sadd.s32 1, %s23
    $region7: #{tpu_custom_call.1} parent=1 // loop_footer_branch
      %22 = sbr.rel target = $region3
    $region8: #{tpu_custom_call.1} parent=1 // loop_exit
      _
    %3118 = vsyncpa [#allocation3], 1
    %s3119 = scalar_lea.sflag [#allocation3], 1
    %3120 = vsyncpa %s3119, 1
    %3121 = vsyncpa [#allocation6], 1
    %3122 = vsyncpa [#allocation9], 1
    %3123 = vsyncpa [#allocation4], 1
    %s3124 = scalar_lea.sflag [#allocation4], 1
    %3125 = vsyncpa %s3124, 1

</llo_original>
